<compile_context>
chip_gen: v7x
topology: tpu7x:2x2x1
jax: 0.10.0
libtpu: 0.0.40
codegen_flags: <defaults>
</compile_context>

<pallas_src>
import math

import jax
import jax.numpy as jnp
from jax import lax
from jax.experimental import pallas as pl
from jax.experimental.pallas import tpu as pltpu


# ----------------------------------------------------------------------------
# Fused Cooc layer kernel (all 3 branches, b_blk batch samples per grid step).
#   y_r = relu(W_r @ x_r + b_r)   (1x1 conv + folded BN + folded 1/sqrt(HW))
#   G_r = y_r @ y_r^T             (already normalized by H*W via the fold)
# ----------------------------------------------------------------------------
def cooc_layers(ax, bx, cx, w_cooc, b_cooc, *, b_blk=None):
    """ax/bx/cx: (B, C, HW) bf16; w_cooc: (3, D, C) bf16; b_cooc: (3, D, 1) f32.
    Returns grams: (B, 3, D, D) bf16."""
    B, C, HW = ax.shape
    _, D, _ = w_cooc.shape

    if b_blk is None:
        # Amortize per-step pipeline overhead over a few samples, but keep at
        # least 2 grid steps so both v7x TensorCores get work.
        b_blk = max(1, min(4, B // 2))
    while B % b_blk:
        b_blk -= 1
    n_b = B // b_blk

    def kernel(ax_ref, bx_ref, cx_ref, w_ref, b_ref, o_ref):
        acts = (ax_ref, bx_ref, cx_ref)
        for i in range(b_blk):                          # static unroll over samples
            for r in range(3):                          # static unroll, 3 branches
                x = acts[r][i]                          # (C, HW) bf16
                y = jnp.dot(w_ref[r], x,                # (D, HW) f32 accumulate
                            preferred_element_type=jnp.float32)
                y = jnp.maximum(y + b_ref[r], 0.0)      # bias + ReLU in f32
                # Gram from f32 y (no bf16 rounding of the activations);
                # contracts the HW (last) axis of both operands. Tiny matmul.
                g = lax.dot_general(y, y, (((1,), (1,)), ((), ())),
                                    preferred_element_type=jnp.float32)
                o_ref[i, r] = g.astype(o_ref.dtype)

    return pl.pallas_call(
        kernel,
        out_shape=jax.ShapeDtypeStruct((B, 3, D, D), jnp.bfloat16),
        grid_spec=pltpu.PrefetchScalarGridSpec(
            num_scalar_prefetch=0,
            grid=(n_b,),
            in_specs=[
                pl.BlockSpec((b_blk, C, HW), lambda b: (b, 0, 0)),
                pl.BlockSpec((b_blk, C, HW), lambda b: (b, 0, 0)),
                pl.BlockSpec((b_blk, C, HW), lambda b: (b, 0, 0)),
                pl.BlockSpec((3, D, C), lambda b: (0, 0, 0)),
                pl.BlockSpec((3, D, 1), lambda b: (0, 0, 0)),
            ],
            out_specs=pl.BlockSpec((b_blk, 3, D, D), lambda b: (b, 0, 0, 0)),
        ),
        compiler_params=pltpu.CompilerParams(
            dimension_semantics=("parallel",),
            vmem_limit_bytes=32 * 1024 * 1024),
    )(ax, bx, cx, w_cooc, b_cooc)


# ----------------------------------------------------------------------------
# Fused concat + final linear kernel:
#   logits = [x_flat | grams] @ [w_x ; w_g] + b
# No concatenate is materialized; the K-reduction grid runs the x-phase first
# (n_x steps over w_x) then the gram-phase (n_g steps over w_g).  The output
# (f32, constant block index) is the accumulator itself.
# ----------------------------------------------------------------------------
def _pick_tile(f, tk_max):
    """Largest divisor of f that is a multiple of 128 and <= tk_max, else f."""
    best = None
    for t in range(128, min(f, tk_max) + 1, 128):
        if f % t == 0:
            best = t
    return best if best is not None else f


def linear(x_flat, g_flat, w_x, w_g, b, *, tk_max=16384):
    """x_flat: (B, Fx) bf16; g_flat: (B, Fg) bf16; w_x: (Fx, NC) bf16;
    w_g: (Fg, NC) bf16; b: (1, NC) f32.  Returns (B, NC) f32 logits."""
    B, Fx = x_flat.shape
    _, Fg = g_flat.shape
    _, NC = w_x.shape
    assert w_x.shape[0] == Fx and w_g.shape == (Fg, NC) and b.shape == (1, NC)

    tkx = _pick_tile(Fx, tk_max)
    tkg = _pick_tile(Fg, tk_max)
    n_x = Fx // tkx
    n_g = Fg // tkg
    n_total = n_x + n_g

    def kernel(x_ref, g_ref, wx_ref, wg_ref, b_ref, o_ref):
        k = pl.program_id(0)

        @pl.when(k == 0)
        def _():
            o_ref[...] = jnp.zeros_like(o_ref)

        @pl.when(k < n_x)
        def _():
            o_ref[...] += jnp.dot(x_ref[...], wx_ref[...],
                                  preferred_element_type=jnp.float32)

        @pl.when(k >= n_x)
        def _():
            o_ref[...] += jnp.dot(g_ref[...], wg_ref[...],
                                  preferred_element_type=jnp.float32)

        @pl.when(k == n_total - 1)
        def _():
            o_ref[...] += b_ref[...]

    return pl.pallas_call(
        kernel,
        out_shape=jax.ShapeDtypeStruct((B, NC), jnp.float32),
        grid_spec=pltpu.PrefetchScalarGridSpec(
            num_scalar_prefetch=0,
            grid=(n_total,),
            in_specs=[
                # Clamp so the inactive operand keeps a constant block index
                # (no re-DMA during the other phase).
                pl.BlockSpec((B, tkx), lambda k: (0, jnp.minimum(k, n_x - 1))),
                pl.BlockSpec((B, tkg), lambda k: (0, jnp.maximum(k - n_x, 0))),
                pl.BlockSpec((tkx, NC), lambda k: (jnp.minimum(k, n_x - 1), 0)),
                pl.BlockSpec((tkg, NC), lambda k: (jnp.maximum(k - n_x, 0), 0)),
                pl.BlockSpec((1, NC), lambda k: (0, 0)),
            ],
            out_specs=pl.BlockSpec((B, NC), lambda k: (0, 0)),
        ),
        compiler_params=pltpu.CompilerParams(
            dimension_semantics=("arbitrary",),
            vmem_limit_bytes=32 * 1024 * 1024),
    )(x_flat, g_flat, w_x, w_g, b)


# ----------------------------------------------------------------------------
# Parameter setup (deterministic, synthetic) and full forward.
# ----------------------------------------------------------------------------
def init_params(key, C, HW, D, num_classes):
    ks = jax.random.split(key, 8)
    eps = 1e-5
    bn_scale = 1.0 / jnp.sqrt(1.0 + eps)        # BN(gamma=1, beta=0, mean=0, var=1) fold
    gram_scale = 1.0 / math.sqrt(float(HW))     # 1/(H*W) Gram norm folded (ReLU pos. homog.)
    scale = bn_scale * gram_scale

    def cooc_params(kw, kb):
        w = jax.random.normal(kw, (D, C), jnp.float32) / jnp.sqrt(C)
        bb = jax.random.normal(kb, (D,), jnp.float32) * 0.01
        return (w * scale).astype(jnp.bfloat16), (bb * scale).reshape(D, 1)

    wa, ba = cooc_params(ks[0], ks[1])
    wb, bb = cooc_params(ks[2], ks[3])
    wc, bc = cooc_params(ks[4], ks[5])
    w_cooc = jnp.stack([wa, wb, wc], axis=0)                    # (3, D, C) bf16
    b_cooc = jnp.stack([ba, bb, bc], axis=0)                    # (3, D, 1) f32

    feat_x = C * HW
    feat_g = 3 * D * D
    feat_dim = feat_x + feat_g

    # last_linear weight, rows ordered [x_flat | gram_a | gram_b | gram_c];
    # stored pre-split into the x-phase and gram-phase slices, UNPADDED classes.
    w_last = (jax.random.normal(ks[6], (feat_dim, num_classes), jnp.float32)
              / jnp.sqrt(feat_dim)).astype(jnp.bfloat16)
    b_last = (jax.random.normal(ks[7], (num_classes,), jnp.float32) * 0.01
              ).reshape(1, num_classes)

    return dict(w_cooc=w_cooc, b_cooc=b_cooc,
                w_last_x=w_last[:feat_x], w_last_g=w_last[feat_x:],
                b_last=b_last, num_classes=num_classes)


def deepcooc_forward(feats, params):
    # feats = (x, ax, bx, cx), each NCHW bf16, mirroring the backbone outputs.
    x, ax, bx, cx = feats
    B, C, H, W = x.shape
    HW = H * W
    # NCHW -> (B, C, HW): a free reshape, no transpose.
    grams = cooc_layers(ax.reshape(B, C, HW), bx.reshape(B, C, HW),
                        cx.reshape(B, C, HW),
                        params["w_cooc"], params["b_cooc"])      # (B, 3, D, D) bf16
    x_flat = x.reshape(B, C * HW)                                # .view(b, -1) equivalent
    g_flat = grams.reshape(B, -1)                                # [a | b | c] = cat order
    return linear(x_flat, g_flat, params["w_last_x"], params["w_last_g"],
                  params["b_last"])


if __name__ == "__main__":
    # Stand-in shapes: C=128 (for 2048), 8x8 spatial (real), D=128 (real).
    B, C, H, W = 2, 128, 8, 8
    D = 128
    num_classes = 10
    HW = H * W

    key = jax.random.PRNGKey(0)
    k1, k2, k3, k4, kp = jax.random.split(key, 5)
    # TODO(synk): resnet152 backbone is external/pretrained; its four feature
    # maps are synthesized here directly (assumed bf16 activations).
    x = jax.random.normal(k1, (B, C, H, W), jnp.float32).astype(jnp.bfloat16)
    ax = jax.random.normal(k2, (B, C, H, W), jnp.float32).astype(jnp.bfloat16)
    bx = jax.random.normal(k3, (B, C, H, W), jnp.float32).astype(jnp.bfloat16)
    cx = jax.random.normal(k4, (B, C, H, W), jnp.float32).astype(jnp.bfloat16)

    params = init_params(kp, C, HW, D, num_classes)
    out = deepcooc_forward((x, ax, bx, cx), params)
    out = jax.block_until_ready(out)
    assert out.shape == (B, num_classes)
    assert bool(jnp.all(jnp.isfinite(out)))
    print("KERNEL_OK")
</pallas_src>

<mosaic_0001>
module attributes {stable_mosaic.version = 11 : i64} {
  func.func @kernel(%arg0: i32, %arg1: memref<1x128x64xbf16, #tpu.memory_space<vmem>>, %arg2: memref<1x128x64xbf16, #tpu.memory_space<vmem>>, %arg3: memref<1x128x64xbf16, #tpu.memory_space<vmem>>, %arg4: memref<3x128x128xbf16, #tpu.memory_space<vmem>>, %arg5: memref<3x128x1xf32, #tpu.memory_space<vmem>>, %arg6: memref<1x3x128x128xbf16, #tpu.memory_space<vmem>>) attributes {dimension_semantics = [#tpu.dimension_semantics<parallel>], iteration_bounds = array<i64: 2>, scalar_prefetch = 0 : i64, scratch_operands = 0 : i64, tpu.core_type = #tpu.core_type<tc>, window_params = [{transform_indices = @transform_0, window_bounds = array<i64: 1, 128, 64>}, {transform_indices = @transform_1, window_bounds = array<i64: 1, 128, 64>}, {transform_indices = @transform_2, window_bounds = array<i64: 1, 128, 64>}, {pipeline_mode = #tpu.pipeline_mode<synchronous>, transform_indices = @transform_3, window_bounds = array<i64: 3, 128, 128>}, {pipeline_mode = #tpu.pipeline_mode<synchronous>, transform_indices = @transform_4, window_bounds = array<i64: 3, 128, 1>}, {transform_indices = @transform_5, window_bounds = array<i64: 1, 3, 128, 128>}]} {
    %c0 = arith.constant 0 : index
    %c0_0 = arith.constant 0 : index
    %c0_1 = arith.constant 0 : index
    %0 = vector.load %arg1[%c0, %c0_0, %c0_1] : memref<1x128x64xbf16, #tpu.memory_space<vmem>>, vector<1x128x64xbf16>
    %1 = vector.shape_cast %0 : vector<1x128x64xbf16> to vector<128x64xbf16>
    %c0_2 = arith.constant 0 : index
    %c0_3 = arith.constant 0 : index
    %c0_4 = arith.constant 0 : index
    %2 = vector.load %arg4[%c0_2, %c0_3, %c0_4] : memref<3x128x128xbf16, #tpu.memory_space<vmem>>, vector<1x128x128xbf16>
    %3 = vector.shape_cast %2 : vector<1x128x128xbf16> to vector<128x128xbf16>
    %cst = arith.constant dense<0.000000e+00> : vector<128x64xf32>
    %4 = tpu.matmul %3, %1, %cst {dimension_numbers = #tpu.dot_dimension_numbers<[1], [0], [0], [1], [0, 0, 1, 1], [], []>} : vector<128x128xbf16>, vector<128x64xbf16>, vector<128x64xf32> -> vector<128x64xf32>
    %c0_5 = arith.constant 0 : index
    %c0_6 = arith.constant 0 : index
    %c0_7 = arith.constant 0 : index
    %5 = vector.load %arg5[%c0_5, %c0_6, %c0_7] : memref<3x128x1xf32, #tpu.memory_space<vmem>>, vector<1x128x1xf32>
    %6 = vector.shape_cast %5 : vector<1x128x1xf32> to vector<128x1xf32>
    %7 = vector.broadcast %6 : vector<128x1xf32> to vector<128x64xf32>
    %8 = arith.addf %4, %7 : vector<128x64xf32>
    %cst_8 = arith.constant 0.000000e+00 : f32
    %9 = vector.broadcast %cst_8 : f32 to vector<128x64xf32>
    %10 = arith.maximumf %8, %9 : vector<128x64xf32>
    %cst_9 = arith.constant dense<0.000000e+00> : vector<128x128xf32>
    %11 = tpu.matmul %10, %10, %cst_9 {dimension_numbers = #tpu.dot_dimension_numbers<[1], [1], [0], [0], [0, 0, 1, 0], [], []>} : vector<128x64xf32>, vector<128x64xf32>, vector<128x128xf32> -> vector<128x128xf32>
    %12 = arith.truncf %11 : vector<128x128xf32> to vector<128x128xbf16>
    %c0_10 = arith.constant 0 : index
    %c0_11 = arith.constant 0 : index
    %c0_12 = arith.constant 0 : index
    %c0_13 = arith.constant 0 : index
    %13 = vector.load %arg6[%c0_10, %c0_11, %c0_12, %c0_13] : memref<1x3x128x128xbf16, #tpu.memory_space<vmem>>, vector<1x1x128x128xbf16>
    %14 = vector.shape_cast %13 : vector<1x1x128x128xbf16> to vector<128x128xbf16>
    %15 = vector.shape_cast %12 : vector<128x128xbf16> to vector<1x1x128x128xbf16>
    tpu.vector_store %arg6[%c0_10, %c0_11, %c0_12, %c0_13], %15 {strides = array<i32>} : memref<1x3x128x128xbf16, #tpu.memory_space<vmem>>, vector<1x1x128x128xbf16>,
    %c0_14 = arith.constant 0 : index
    %c0_15 = arith.constant 0 : index
    %c0_16 = arith.constant 0 : index
    %16 = vector.load %arg2[%c0_14, %c0_15, %c0_16] : memref<1x128x64xbf16, #tpu.memory_space<vmem>>, vector<1x128x64xbf16>
    %17 = vector.shape_cast %16 : vector<1x128x64xbf16> to vector<128x64xbf16>
    %c1 = arith.constant 1 : index
    %c0_17 = arith.constant 0 : index
    %c0_18 = arith.constant 0 : index
    %18 = vector.load %arg4[%c1, %c0_17, %c0_18] : memref<3x128x128xbf16, #tpu.memory_space<vmem>>, vector<1x128x128xbf16>
    %19 = vector.shape_cast %18 : vector<1x128x128xbf16> to vector<128x128xbf16>
    %cst_19 = arith.constant dense<0.000000e+00> : vector<128x64xf32>
    %20 = tpu.matmul %19, %17, %cst_19 {dimension_numbers = #tpu.dot_dimension_numbers<[1], [0], [0], [1], [0, 0, 1, 1], [], []>} : vector<128x128xbf16>, vector<128x64xbf16>, vector<128x64xf32> -> vector<128x64xf32>
    %c1_20 = arith.constant 1 : index
    %c0_21 = arith.constant 0 : index
    %c0_22 = arith.constant 0 : index
    %21 = vector.load %arg5[%c1_20, %c0_21, %c0_22] : memref<3x128x1xf32, #tpu.memory_space<vmem>>, vector<1x128x1xf32>
    %22 = vector.shape_cast %21 : vector<1x128x1xf32> to vector<128x1xf32>
    %23 = vector.broadcast %22 : vector<128x1xf32> to vector<128x64xf32>
    %24 = arith.addf %20, %23 : vector<128x64xf32>
    %cst_23 = arith.constant 0.000000e+00 : f32
    %25 = vector.broadcast %cst_23 : f32 to vector<128x64xf32>
    %26 = arith.maximumf %24, %25 : vector<128x64xf32>
    %cst_24 = arith.constant dense<0.000000e+00> : vector<128x128xf32>
    %27 = tpu.matmul %26, %26, %cst_24 {dimension_numbers = #tpu.dot_dimension_numbers<[1], [1], [0], [0], [0, 0, 1, 0], [], []>} : vector<128x64xf32>, vector<128x64xf32>, vector<128x128xf32> -> vector<128x128xf32>
    %28 = arith.truncf %27 : vector<128x128xf32> to vector<128x128xbf16>
    %c0_25 = arith.constant 0 : index
    %c1_26 = arith.constant 1 : index
    %c0_27 = arith.constant 0 : index
    %c0_28 = arith.constant 0 : index
    %29 = vector.load %arg6[%c0_25, %c1_26, %c0_27, %c0_28] : memref<1x3x128x128xbf16, #tpu.memory_space<vmem>>, vector<1x1x128x128xbf16>
    %30 = vector.shape_cast %29 : vector<1x1x128x128xbf16> to vector<128x128xbf16>
    %31 = vector.shape_cast %28 : vector<128x128xbf16> to vector<1x1x128x128xbf16>
    tpu.vector_store %arg6[%c0_25, %c1_26, %c0_27, %c0_28], %31 {strides = array<i32>} : memref<1x3x128x128xbf16, #tpu.memory_space<vmem>>, vector<1x1x128x128xbf16>,
    %c0_29 = arith.constant 0 : index
    %c0_30 = arith.constant 0 : index
    %c0_31 = arith.constant 0 : index
    %32 = vector.load %arg3[%c0_29, %c0_30, %c0_31] : memref<1x128x64xbf16, #tpu.memory_space<vmem>>, vector<1x128x64xbf16>
    %33 = vector.shape_cast %32 : vector<1x128x64xbf16> to vector<128x64xbf16>
    %c2 = arith.constant 2 : index
    %c0_32 = arith.constant 0 : index
    %c0_33 = arith.constant 0 : index
    %34 = vector.load %arg4[%c2, %c0_32, %c0_33] : memref<3x128x128xbf16, #tpu.memory_space<vmem>>, vector<1x128x128xbf16>
    %35 = vector.shape_cast %34 : vector<1x128x128xbf16> to vector<128x128xbf16>
    %cst_34 = arith.constant dense<0.000000e+00> : vector<128x64xf32>
    %36 = tpu.matmul %35, %33, %cst_34 {dimension_numbers = #tpu.dot_dimension_numbers<[1], [0], [0], [1], [0, 0, 1, 1], [], []>} : vector<128x128xbf16>, vector<128x64xbf16>, vector<128x64xf32> -> vector<128x64xf32>
    %c2_35 = arith.constant 2 : index
    %c0_36 = arith.constant 0 : index
    %c0_37 = arith.constant 0 : index
    %37 = vector.load %arg5[%c2_35, %c0_36, %c0_37] : memref<3x128x1xf32, #tpu.memory_space<vmem>>, vector<1x128x1xf32>
    %38 = vector.shape_cast %37 : vector<1x128x1xf32> to vector<128x1xf32>
    %39 = vector.broadcast %38 : vector<128x1xf32> to vector<128x64xf32>
    %40 = arith.addf %36, %39 : vector<128x64xf32>
    %cst_38 = arith.constant 0.000000e+00 : f32
    %41 = vector.broadcast %cst_38 : f32 to vector<128x64xf32>
    %42 = arith.maximumf %40, %41 : vector<128x64xf32>
    %cst_39 = arith.constant dense<0.000000e+00> : vector<128x128xf32>
    %43 = tpu.matmul %42, %42, %cst_39 {dimension_numbers = #tpu.dot_dimension_numbers<[1], [1], [0], [0], [0, 0, 1, 0], [], []>} : vector<128x64xf32>, vector<128x64xf32>, vector<128x128xf32> -> vector<128x128xf32>
    %44 = arith.truncf %43 : vector<128x128xf32> to vector<128x128xbf16>
    %c0_40 = arith.constant 0 : index
    %c2_41 = arith.constant 2 : index
    %c0_42 = arith.constant 0 : index
    %c0_43 = arith.constant 0 : index
    %45 = vector.load %arg6[%c0_40, %c2_41, %c0_42, %c0_43] : memref<1x3x128x128xbf16, #tpu.memory_space<vmem>>, vector<1x1x128x128xbf16>
    %46 = vector.shape_cast %45 : vector<1x1x128x128xbf16> to vector<128x128xbf16>
    %47 = vector.shape_cast %44 : vector<128x128xbf16> to vector<1x1x128x128xbf16>
    tpu.vector_store %arg6[%c0_40, %c2_41, %c0_42, %c0_43], %47 {strides = array<i32>} : memref<1x3x128x128xbf16, #tpu.memory_space<vmem>>, vector<1x1x128x128xbf16>,
    return
  }
  func.func @transform_0(%arg0: i32) -> (i32, i32, i32) {
    %c0_i32 = arith.constant 0 : i32
    %c0_i32_0 = arith.constant 0 : i32
    %c0_i32_1 = arith.constant 0 : i32
    return %arg0, %c0_i32, %c0_i32_0 : i32, i32, i32
  }
  func.func @transform_1(%arg0: i32) -> (i32, i32, i32) {
    %c0_i32 = arith.constant 0 : i32
    %c0_i32_0 = arith.constant 0 : i32
    %c0_i32_1 = arith.constant 0 : i32
    return %arg0, %c0_i32, %c0_i32_0 : i32, i32, i32
  }
  func.func @transform_2(%arg0: i32) -> (i32, i32, i32) {
    %c0_i32 = arith.constant 0 : i32
    %c0_i32_0 = arith.constant 0 : i32
    %c0_i32_1 = arith.constant 0 : i32
    return %arg0, %c0_i32, %c0_i32_0 : i32, i32, i32
  }
  func.func @transform_3(%arg0: i32) -> (i32, i32, i32) {
    %c0_i32 = arith.constant 0 : i32
    %c0_i32_0 = arith.constant 0 : i32
    %c0_i32_1 = arith.constant 0 : i32
    %c0_i32_2 = arith.constant 0 : i32
    return %c0_i32, %c0_i32_0, %c0_i32_1 : i32, i32, i32
  }
  func.func @transform_4(%arg0: i32) -> (i32, i32, i32) {
    %c0_i32 = arith.constant 0 : i32
    %c0_i32_0 = arith.constant 0 : i32
    %c0_i32_1 = arith.constant 0 : i32
    %c0_i32_2 = arith.constant 0 : i32
    return %c0_i32, %c0_i32_0, %c0_i32_1 : i32, i32, i32
  }
  func.func @transform_5(%arg0: i32) -> (i32, i32, i32, i32) {
    %c0_i32 = arith.constant 0 : i32
    %c0_i32_0 = arith.constant 0 : i32
    %c0_i32_1 = arith.constant 0 : i32
    %c0_i32_2 = arith.constant 0 : i32
    return %arg0, %c0_i32, %c0_i32_0, %c0_i32_1 : i32, i32, i32, i32
  }
}

</mosaic_0001>

<llo_original>
// kernel: tpu_custom_call.1
$region0: #{tpu_custom_call.1}
  #allocation0 [shape = 'u32[]', space=smem, size = 0x4, offset = 0x4, fixed_abs, tag = 'smem constant byte address 0x4 - core index']
  #allocation1 [shape = 'u32[144,128]{1,0:T(1,128)}', space=vmem, size = 0x12000, scoped, tag = 'internal scratch']
  %s0 = inlined_call_operand.vmem [shape: bf16[2,128,64], index: 0, kind: input, shape index: {}]
  %s1 = inlined_call_operand.vmem [shape: bf16[2,128,64], index: 1, kind: input, shape index: {}]
  %s2 = inlined_call_operand.vmem [shape: bf16[2,128,64], index: 2, kind: input, shape index: {}]
  %s3 = inlined_call_operand.vmem [shape: bf16[3,128,128], index: 3, kind: input, shape index: {}]
  %s4 = inlined_call_operand.vmem [shape: f32[3,128,1], index: 4, kind: input, shape index: {}]
  %s5 = inlined_call_operand.hbm [shape: bf16[2,3,128,128], index: 5, kind: output, shape index: {}]
  %s6 = sld [smem:[#allocation0]]
  $region53: #{tpu_custom_call.1} parent=0
    _
  %s8 = ssub.s32 1, %s6
  %s9 = scalar_select 0, %s8, %s6
  $region1: #{tpu_custom_call.1} parent=0
    #allocation2 [shape = 'u8[196608]{0}', space=vmem, size = 0x30000, scoped, tag = 'output window, operand 0']
    #allocation3 [shape = 's32[2]{0}', space=sflag, size = 0x8, scoped, tag = 'scoped memory for tpu_custom_call.1']
    %10 = vsyncpa [#allocation3], 0
    %s11 = scalar_lea.sflag [#allocation3], 1
    %12 = vsyncpa %s11, 0
    loop: start=0, step=1, limit=4
    $region2: #{tpu_custom_call.1} parent=1 // loop_pre_header
      _
    $region3: #{tpu_custom_call.1} parent=1 // loop_header
      %s14 = sphi 0, %s18
      %p15 = scmp.ge.s32.totalorder %s14, 4
      %s24 = sphi 0, %s26
      %s27 = sphi 0, %s24
      %s28 = sphi 0, %s27
      %s44 = sphi 0, %s28
      %s50 = sphi 0, %s52
      %s53 = sphi 0, %s50
      %s54 = sphi 0, %s53
      %s70 = sphi 0, %s54
      %s76 = sphi 0, %s78
      %s79 = sphi 0, %s76
      %s80 = sphi 0, %s79
      %s96 = sphi 0, %s80
      %s100 = sphi 0, %s100
      %s102 = sphi 0, %s100
      %s103 = sphi 0, %s102
      %s117 = sphi 0, %s103
      %s121 = sphi 0, %s121
      %s123 = sphi 0, %s121
      %s124 = sphi 0, %s123
      %s138 = sphi 0, %s124
      %s144 = sphi 0, %s146
      %s147 = sphi 0, %s144
      %s148 = sphi 0, %s147
      %s164 = sphi 0, %s148
    $region4: #{tpu_custom_call.1} parent=1 // loop_header_branch
      %17 = sbr.rel (%p15) target = $region8
    $region5: #{tpu_custom_call.1} parent=1 // loop_body
      %s19 = ssub.s32 %s14, 1
      %s20 = ssub.s32 %s14, 2
      %s21 = sadd.s32 %s14, 1
      %s22 = ssub.s32 %s14, %s21
      %p23 = scmp.eq.s32.totalorder %s22, 0
      %s25 = sadd.s32 %s24, 1
      %s26 = scalar_select %p23, %s24, %s25
      %p29 = pneg %p23
      %p30 = scmp.eq.s32.totalorder %s14, 1
      %p31 = por %p29, %p30
      %p32 = scmp.ne.s32.totalorder %s24, %s27
      %p33 = scmp.eq.s32.totalorder %s14, 0
      %p34 = por %p32, %p33
      %p35 = scmp.ne.s32.totalorder %s24, %s27
      %p36 = scmp.eq.s32.totalorder %s19, 1
      %p37 = por %p35, %p36
      %p38 = scmp.ne.s32.totalorder %s27, %s28
      %p39 = scmp.eq.s32.totalorder %s19, 0
      %p40 = por %p38, %p39
      %p41 = scmp.ne.s32.totalorder %s27, %s28
      %p42 = scmp.eq.s32.totalorder %s20, 1
      %p43 = por %p41, %p42
      %p45 = scmp.ne.s32.totalorder %s28, %s44
      %p46 = scmp.eq.s32.totalorder %s20, 0
      %p47 = por %p45, %p46
      %s48 = ssub.s32 %s14, %s21
      %p49 = scmp.eq.s32.totalorder %s48, 0
      %s51 = sadd.s32 %s50, 1
      %s52 = scalar_select %p49, %s50, %s51
      %p55 = pneg %p49
      %p56 = scmp.eq.s32.totalorder %s14, 1
      %p57 = por %p55, %p56
      %p58 = scmp.ne.s32.totalorder %s50, %s53
      %p59 = scmp.eq.s32.totalorder %s14, 0
      %p60 = por %p58, %p59
      %p61 = scmp.ne.s32.totalorder %s50, %s53
      %p62 = scmp.eq.s32.totalorder %s19, 1
      %p63 = por %p61, %p62
      %p64 = scmp.ne.s32.totalorder %s53, %s54
      %p65 = scmp.eq.s32.totalorder %s19, 0
      %p66 = por %p64, %p65
      %p67 = scmp.ne.s32.totalorder %s53, %s54
      %p68 = scmp.eq.s32.totalorder %s20, 1
      %p69 = por %p67, %p68
      %p71 = scmp.ne.s32.totalorder %s54, %s70
      %p72 = scmp.eq.s32.totalorder %s20, 0
      %p73 = por %p71, %p72
      %s74 = ssub.s32 %s14, %s21
      %p75 = scmp.eq.s32.totalorder %s74, 0
      %s77 = sadd.s32 %s76, 1
      %s78 = scalar_select %p75, %s76, %s77
      %p81 = pneg %p75
      %p82 = scmp.eq.s32.totalorder %s14, 1
      %p83 = por %p81, %p82
      %p84 = scmp.ne.s32.totalorder %s76, %s79
      %p85 = scmp.eq.s32.totalorder %s14, 0
      %p86 = por %p84, %p85
      %p87 = scmp.ne.s32.totalorder %s76, %s79
      %p88 = scmp.eq.s32.totalorder %s19, 1
      %p89 = por %p87, %p88
      %p90 = scmp.ne.s32.totalorder %s79, %s80
      %p91 = scmp.eq.s32.totalorder %s19, 0
      %p92 = por %p90, %p91
      %p93 = scmp.ne.s32.totalorder %s79, %s80
      %p94 = scmp.eq.s32.totalorder %s20, 1
      %p95 = por %p93, %p94
      %p97 = scmp.ne.s32.totalorder %s80, %s96
      %p98 = scmp.eq.s32.totalorder %s20, 0
      %p99 = por %p97, %p98
      %s101 = sadd.s32 %s100, 1
      %p104 = scmp.eq.s32.totalorder %s14, 1
      %p105 = scmp.ne.s32.totalorder %s100, %s102
      %p106 = scmp.eq.s32.totalorder %s14, 0
      %p107 = por %p105, %p106
      %p108 = scmp.ne.s32.totalorder %s100, %s102
      %p109 = scmp.eq.s32.totalorder %s19, 1
      %p110 = por %p108, %p109
      %p111 = scmp.ne.s32.totalorder %s102, %s103
      %p112 = scmp.eq.s32.totalorder %s19, 0
      %p113 = por %p111, %p112
      %p114 = scmp.ne.s32.totalorder %s102, %s103
      %p115 = scmp.eq.s32.totalorder %s20, 1
      %p116 = por %p114, %p115
      %p118 = scmp.ne.s32.totalorder %s103, %s117
      %p119 = scmp.eq.s32.totalorder %s20, 0
      %p120 = por %p118, %p119
      %s122 = sadd.s32 %s121, 1
      %p125 = scmp.eq.s32.totalorder %s14, 1
      %p126 = scmp.ne.s32.totalorder %s121, %s123
      %p127 = scmp.eq.s32.totalorder %s14, 0
      %p128 = por %p126, %p127
      %p129 = scmp.ne.s32.totalorder %s121, %s123
      %p130 = scmp.eq.s32.totalorder %s19, 1
      %p131 = por %p129, %p130
      %p132 = scmp.ne.s32.totalorder %s123, %s124
      %p133 = scmp.eq.s32.totalorder %s19, 0
      %p134 = por %p132, %p133
      %p135 = scmp.ne.s32.totalorder %s123, %s124
      %p136 = scmp.eq.s32.totalorder %s20, 1
      %p137 = por %p135, %p136
      %p139 = scmp.ne.s32.totalorder %s124, %s138
      %p140 = scmp.eq.s32.totalorder %s20, 0
      %p141 = por %p139, %p140
      %s142 = ssub.s32 %s14, %s21
      %p143 = scmp.eq.s32.totalorder %s142, 0
      %s145 = sadd.s32 %s144, 1
      %s146 = scalar_select %p143, %s144, %s145
      %p149 = pneg %p143
      %p150 = scmp.eq.s32.totalorder %s14, 1
      %p151 = por %p149, %p150
      %p152 = scmp.ne.s32.totalorder %s144, %s147
      %p153 = scmp.eq.s32.totalorder %s14, 0
      %p154 = por %p152, %p153
      %p155 = scmp.ne.s32.totalorder %s144, %s147
      %p156 = scmp.eq.s32.totalorder %s19, 1
      %p157 = por %p155, %p156
      %p158 = scmp.ne.s32.totalorder %s147, %s148
      %p159 = scmp.eq.s32.totalorder %s19, 0
      %p160 = por %p158, %p159
      %p161 = scmp.ne.s32.totalorder %s147, %s148
      %p162 = scmp.eq.s32.totalorder %s20, 1
      %p163 = por %p161, %p162
      %p165 = scmp.ne.s32.totalorder %s148, %s164
      %p166 = scmp.eq.s32.totalorder %s20, 0
      %p167 = por %p165, %p166
      %p168 = scmp.le.s32.totalorder 1, %s14
      %p169 = scmp.lt.s32.totalorder %s14, 3
      %p170 = pnand %p168, %p169
      %p171 = pneg %p170
      // Predicated region
      $region9: #{tpu_custom_call.1} parent=5 // pred_check
        _
      $region10: #{tpu_custom_call.1} parent=5 // pred_check_branch
        %173 = sbr.rel (%p170) target = $region12
      $region11: #{tpu_custom_call.1} parent=5 // pred_region
        %s174 = ssub.s32 %s14, 1
        // Predicated region
        $region13: #{tpu_custom_call.1} parent=11 // pred_check
          %p175 = pneg %p113
        $region14: #{tpu_custom_call.1} parent=11 // pred_check_branch
          %177 = sbr.rel (%p175) target = $region16
        $region15: #{tpu_custom_call.1} parent=11 // pred_region
          _
        $region16: #{tpu_custom_call.1} parent=11 // pred_fallthru
          _
        // Predicated region
        $region17: #{tpu_custom_call.1} parent=11 // pred_check
          %p178 = pneg %p134
        $region18: #{tpu_custom_call.1} parent=11 // pred_check_branch
          %180 = sbr.rel (%p178) target = $region20
        $region19: #{tpu_custom_call.1} parent=11 // pred_region
          _
        $region20: #{tpu_custom_call.1} parent=11 // pred_fallthru
          _
      $region12: #{tpu_custom_call.1} parent=5 // pred_fallthru
        _
      %p181 = scmp.lt.s32.totalorder %s14, 2
      // Predicated region
      $region21: #{tpu_custom_call.1} parent=5 // pred_check
        %p182 = pneg %p181
      $region22: #{tpu_custom_call.1} parent=5 // pred_check_branch
        %184 = sbr.rel (%p182) target = $region24
      $region23: #{tpu_custom_call.1} parent=5 // pred_region
        // Predicated region
        $region25: #{tpu_custom_call.1} parent=23 // pred_check
          %p185 = pneg %p34
        $region26: #{tpu_custom_call.1} parent=23 // pred_check_branch
          %187 = sbr.rel (%p185) target = $region28
        $region27: #{tpu_custom_call.1} parent=23 // pred_region
          %p188 = scmp.lt.s32.totalorder %s14, 1
          %s189 = scalar_select %p188, %s14, 1
          %s190 = smul.addr %s189, 16
          %s191 = smul.addr %s190, 4
          %s192 = scalar_lea.vmem %s0, %s191
        $region28: #{tpu_custom_call.1} parent=23 // pred_fallthru
          _
        // Predicated region
        $region29: #{tpu_custom_call.1} parent=23 // pred_check
          %p193 = pneg %p60
        $region30: #{tpu_custom_call.1} parent=23 // pred_check_branch
          %195 = sbr.rel (%p193) target = $region32
        $region31: #{tpu_custom_call.1} parent=23 // pred_region
          %p196 = scmp.lt.s32.totalorder %s14, 1
          %s197 = scalar_select %p196, %s14, 1
          %s198 = smul.addr %s197, 16
          %s199 = smul.addr %s198, 4
          %s200 = scalar_lea.vmem %s1, %s199
        $region32: #{tpu_custom_call.1} parent=23 // pred_fallthru
          _
        // Predicated region
        $region33: #{tpu_custom_call.1} parent=23 // pred_check
          %p201 = pneg %p86
        $region34: #{tpu_custom_call.1} parent=23 // pred_check_branch
          %203 = sbr.rel (%p201) target = $region36
        $region35: #{tpu_custom_call.1} parent=23 // pred_region
          %p204 = scmp.lt.s32.totalorder %s14, 1
          %s205 = scalar_select %p204, %s14, 1
          %s206 = smul.addr %s205, 16
          %s207 = smul.addr %s206, 4
          %s208 = scalar_lea.vmem %s2, %s207
        $region36: #{tpu_custom_call.1} parent=23 // pred_fallthru
          _
      $region24: #{tpu_custom_call.1} parent=5 // pred_fallthru
        _
      %p209 = scmp.le.s32.totalorder 1, %s14
      %p210 = scmp.lt.s32.totalorder %s14, 3
      %p211 = pnand %p209, %p210
      %p212 = pneg %p211
      // Predicated region
      $region37: #{tpu_custom_call.1} parent=5 // pred_check
        _
      $region38: #{tpu_custom_call.1} parent=5 // pred_check_branch
        %214 = sbr.rel (%p211) target = $region40
      $region39: #{tpu_custom_call.1} parent=5 // pred_region
        %s215 = ssub.s32 %s14, 1
        %p216 = scmp.lt.s32.totalorder %s19, 1
        %s217 = scalar_select %p216, %s19, 1
        %s218 = smul.addr %s217, 16
        %s219 = smul.addr %s218, 4
        %s220 = scalar_lea.vmem %s0, %s219
        %p221 = pneg %p40
        %p222 = pneg %p37
        %p223 = scmp.lt.s32.totalorder %s19, 1
        %s224 = scalar_select %p223, %s19, 1
        %s225 = smul.addr %s224, 16
        %s226 = smul.addr %s225, 4
        %s227 = scalar_lea.vmem %s1, %s226
        %p228 = pneg %p66
        %p229 = pneg %p63
        %p230 = scmp.lt.s32.totalorder %s19, 1
        %s231 = scalar_select %p230, %s19, 1
        %s232 = smul.addr %s231, 16
        %s233 = smul.addr %s232, 4
        %s234 = scalar_lea.vmem %s2, %s233
        %p235 = pneg %p92
        %p236 = pneg %p89
        %p237 = pneg %p113
        %p238 = pneg %p110
        %p239 = pneg %p134
        %p240 = pneg %p131
        %p241 = pneg %p160
        %p242 = pneg %p157
        %s243 = sand.u32 %s147, 1
        %s244 = scalar_lea.sflag [#allocation3], %s243
        %s245 = sand.u32 %s147, 1
        %s246 = smul.addr %s245, 192
        %s247 = scalar_lea.vmem [#allocation2], %s246
        %p248 = scmp.lt.s32.totalorder %s19, 1
        %s249 = scalar_select %p248, %s19, 1
        %s250 = smul.addr %s249, 16
        %s251 = smul.addr %s250, 4
        %s252 = scalar_lea.vmem %s0, %s251
        %p253 = scmp.lt.s32.totalorder %s19, 1
        %s254 = scalar_select %p253, %s19, 1
        %s255 = smul.addr %s254, 16
        %s256 = smul.addr %s255, 4
        %s257 = scalar_lea.vmem %s1, %s256
        %p258 = scmp.lt.s32.totalorder %s19, 1
        %s259 = scalar_select %p258, %s19, 1
        %s260 = smul.addr %s259, 16
        %s261 = smul.addr %s260, 4
        %s262 = scalar_lea.vmem %s2, %s261
        %v264 = vld [vmem:[%s252] sm:$0xf]
        %v265 = vld [vmem:[%s252 + $0x4] sm:$0xf]
        %v266 = vld [vmem:[%s252 + $0x8] sm:$0xf]
        %v267 = vld [vmem:[%s252 + $0xc] sm:$0xf]
        %v268 = vld [vmem:[%s252 + $0x10] sm:$0xf]
        %v269 = vld [vmem:[%s252 + $0x14] sm:$0xf]
        %v270 = vld [vmem:[%s252 + $0x18] sm:$0xf]
        %v271 = vld [vmem:[%s252 + $0x1c] sm:$0xf]
        %v272 = vld [vmem:[%s252 + $0x20] sm:$0xf]
        %v273 = vld [vmem:[%s252 + $0x24] sm:$0xf]
        %v274 = vld [vmem:[%s252 + $0x28] sm:$0xf]
        %v275 = vld [vmem:[%s252 + $0x2c] sm:$0xf]
        %v276 = vld [vmem:[%s252 + $0x30] sm:$0xf]
        %v277 = vld [vmem:[%s252 + $0x34] sm:$0xf]
        %v278 = vld [vmem:[%s252 + $0x38] sm:$0xf]
        %v279 = vld [vmem:[%s252 + $0x3c] sm:$0xf]
        %v280 = vld [vmem:[%s3] sm:$0xf]
        %v281 = vld [vmem:[%s3 + $0x4] sm:$0xf]
        %v282 = vld [vmem:[%s3 + $0x8] sm:$0xf]
        %v283 = vld [vmem:[%s3 + $0xc] sm:$0xf]
        %v284 = vld [vmem:[%s3 + $0x10] sm:$0xf]
        %v285 = vld [vmem:[%s3 + $0x14] sm:$0xf]
        %v286 = vld [vmem:[%s3 + $0x18] sm:$0xf]
        %v287 = vld [vmem:[%s3 + $0x1c] sm:$0xf]
        %v288 = vld [vmem:[%s3 + $0x20] sm:$0xf]
        %v289 = vld [vmem:[%s3 + $0x24] sm:$0xf]
        %v290 = vld [vmem:[%s3 + $0x28] sm:$0xf]
        %v291 = vld [vmem:[%s3 + $0x2c] sm:$0xf]
        %v292 = vld [vmem:[%s3 + $0x30] sm:$0xf]
        %v293 = vld [vmem:[%s3 + $0x34] sm:$0xf]
        %v294 = vld [vmem:[%s3 + $0x38] sm:$0xf]
        %v295 = vld [vmem:[%s3 + $0x3c] sm:$0xf]
        %v296 = vld [vmem:[%s4] sm:$0xff]
        %v297 = vld [vmem:[%s4 + $0x8] sm:$0xff]
        %v298 = vld [vmem:[%s4 + $0x10] sm:$0xff]
        %v299 = vld [vmem:[%s4 + $0x18] sm:$0xff]
        %v300 = vld [vmem:[%s4 + $0x20] sm:$0xff]
        %v301 = vld [vmem:[%s4 + $0x28] sm:$0xff]
        %v302 = vld [vmem:[%s4 + $0x30] sm:$0xff]
        %v303 = vld [vmem:[%s4 + $0x38] sm:$0xff]
        %v304 = vld [vmem:[%s4 + $0x40] sm:$0xff]
        %v305 = vld [vmem:[%s4 + $0x48] sm:$0xff]
        %v306 = vld [vmem:[%s4 + $0x50] sm:$0xff]
        %v307 = vld [vmem:[%s4 + $0x58] sm:$0xff]
        %v308 = vld [vmem:[%s4 + $0x60] sm:$0xff]
        %v309 = vld [vmem:[%s4 + $0x68] sm:$0xff]
        %v310 = vld [vmem:[%s4 + $0x70] sm:$0xff]
        %v311 = vld [vmem:[%s4 + $0x78] sm:$0xff]
        %313 = vset.pattern.permute.xlu0 0
        %314 = vperm.xlu0 %313, %v296
        %v315 = vpop.permute.xlu0 %314
        %318 = vset.pattern.permute.xlu0 0
        %319 = vperm.xlu0 %318, %v297
        %v320 = vpop.permute.xlu0 %319
        %323 = vset.pattern.permute.xlu0 0
        %324 = vperm.xlu0 %323, %v298
        %v325 = vpop.permute.xlu0 %324
        %328 = vset.pattern.permute.xlu0 0
        %329 = vperm.xlu0 %328, %v299
        %v330 = vpop.permute.xlu0 %329
        %333 = vset.pattern.permute.xlu0 0
        %334 = vperm.xlu0 %333, %v300
        %v335 = vpop.permute.xlu0 %334
        %338 = vset.pattern.permute.xlu0 0
        %339 = vperm.xlu0 %338, %v301
        %v340 = vpop.permute.xlu0 %339
        %343 = vset.pattern.permute.xlu0 0
        %344 = vperm.xlu0 %343, %v302
        %v345 = vpop.permute.xlu0 %344
        %348 = vset.pattern.permute.xlu0 0
        %349 = vperm.xlu0 %348, %v303
        %v350 = vpop.permute.xlu0 %349
        %353 = vset.pattern.permute.xlu0 0
        %354 = vperm.xlu0 %353, %v304
        %v355 = vpop.permute.xlu0 %354
        %358 = vset.pattern.permute.xlu0 0
        %359 = vperm.xlu0 %358, %v305
        %v360 = vpop.permute.xlu0 %359
        %363 = vset.pattern.permute.xlu0 0
        %364 = vperm.xlu0 %363, %v306
        %v365 = vpop.permute.xlu0 %364
        %368 = vset.pattern.permute.xlu0 0
        %369 = vperm.xlu0 %368, %v307
        %v370 = vpop.permute.xlu0 %369
        %373 = vset.pattern.permute.xlu0 0
        %374 = vperm.xlu0 %373, %v308
        %v375 = vpop.permute.xlu0 %374
        %378 = vset.pattern.permute.xlu0 0
        %379 = vperm.xlu0 %378, %v309
        %v380 = vpop.permute.xlu0 %379
        %383 = vset.pattern.permute.xlu0 0
        %384 = vperm.xlu0 %383, %v310
        %v385 = vpop.permute.xlu0 %384
        %388 = vset.pattern.permute.xlu0 0
        %389 = vperm.xlu0 %388, %v311
        %v390 = vpop.permute.xlu0 %389
        %v408 = vunpack.c.l.b16 %v280
        %v409 = vunpack.c.l.b16 %v281
        %v410 = vunpack.c.l.b16 %v282
        %v411 = vunpack.c.l.b16 %v283
        %v412 = vunpack.c.l.b16 %v284
        %v413 = vunpack.c.l.b16 %v285
        %v414 = vunpack.c.l.b16 %v286
        %v415 = vunpack.c.l.b16 %v287
        %v416 = vunpack.c.l.b16 %v288
        %v417 = vunpack.c.l.b16 %v289
        %v418 = vunpack.c.l.b16 %v290
        %v419 = vunpack.c.l.b16 %v291
        %v420 = vunpack.c.l.b16 %v292
        %v421 = vunpack.c.l.b16 %v293
        %v422 = vunpack.c.l.b16 %v294
        %v423 = vunpack.c.l.b16 %v295
        %v424 = vpack.c.b16 %v409, %v408
        %v425 = vpack.c.b16 %v411, %v410
        %v426 = vpack.c.b16 %v413, %v412
        %v427 = vpack.c.b16 %v415, %v414
        %v428 = vpack.c.b16 %v417, %v416
        %v429 = vpack.c.b16 %v419, %v418
        %v430 = vpack.c.b16 %v421, %v420
        %v431 = vpack.c.b16 %v423, %v422
        %v456 = vunpack.c.l.b16 %v264
        %v457 = vunpack.c.l.b16 %v265
        %v458 = vunpack.c.l.b16 %v266
        %v459 = vunpack.c.l.b16 %v267
        %v460 = vunpack.c.l.b16 %v268
        %v461 = vunpack.c.l.b16 %v269
        %v462 = vunpack.c.l.b16 %v270
        %v463 = vunpack.c.l.b16 %v271
        %v464 = vunpack.c.l.b16 %v272
        %v465 = vunpack.c.l.b16 %v273
        %v466 = vunpack.c.l.b16 %v274
        %v467 = vunpack.c.l.b16 %v275
        %v468 = vunpack.c.l.b16 %v276
        %v469 = vunpack.c.l.b16 %v277
        %v470 = vunpack.c.l.b16 %v278
        %v471 = vunpack.c.l.b16 %v279
        %v472 = vpack.c.b16 %v457, %v456
        %v473 = vpack.c.b16 %v459, %v458
        %v474 = vpack.c.b16 %v461, %v460
        %v475 = vpack.c.b16 %v463, %v462
        %v476 = vpack.c.b16 %v465, %v464
        %v477 = vpack.c.b16 %v467, %v466
        %v478 = vpack.c.b16 %v469, %v468
        %v479 = vpack.c.b16 %v471, %v470
        %488 = vmatprep.subr.bf16.mxu0 0
        %489 = vmatpush1.bf16.msra.mxu0 %v472
        %490 = vmatprep.subr.bf16.mxu0 0
        %491 = vmatpush1.bf16.msra.mxu0 %v473
        %492 = vmatprep.subr.bf16.mxu0 0
        %493 = vmatpush1.bf16.msra.mxu0 %v474
        %494 = vmatprep.subr.bf16.mxu0 0
        %495 = vmatpush1.bf16.msra.mxu0 %v475
        %496 = vmatprep.subr.bf16.mxu0 0
        %497 = vmatpush1.bf16.msra.mxu0 %v476
        %498 = vmatprep.subr.bf16.mxu0 0
        %499 = vmatpush1.bf16.msra.mxu0 %v477
        %500 = vmatprep.subr.bf16.mxu0 0
        %501 = vmatpush1.bf16.msra.mxu0 %v478
        %502 = vmatprep.subr.bf16.mxu0 0
        %503 = vmatpush1.bf16.msra.mxu0 %v479
        %504 = vmatprep.subr.bf16.mxu0 0
        %505 = vmatpush1.bf16.msra.mxu0 0
        %506 = vmatprep.subr.bf16.mxu0 0
        %507 = vmatpush1.bf16.msra.mxu0 0
        %508 = vmatprep.subr.bf16.mxu0 0
        %509 = vmatpush1.bf16.msra.mxu0 0
        %510 = vmatprep.subr.bf16.mxu0 0
        %511 = vmatpush1.bf16.msra.mxu0 0
        %512 = vmatprep.subr.bf16.mxu0 0
        %513 = vmatpush1.bf16.msra.mxu0 0
        %514 = vmatprep.subr.bf16.mxu0 0
        %515 = vmatpush1.bf16.msra.mxu0 0
        %516 = vmatprep.subr.bf16.mxu0 0
        %517 = vmatpush1.bf16.msra.mxu0 0
        %518 = vmatprep.subr.bf16.mxu0 0
        %519 = vmatpush1.bf16.msra.mxu0 0
        %520 = vmatprep.mubr.bf16.mxu0 0
        %521 = vmatmul.mubr.bf16.gmra.mrb[0].mxu0 %v424
        %v522 = vpop.f32.mrb[0].mxu0
        %v523 = vadd.f32 %v315, %v522
        %v524 = vpop.f32.mrb[0].mxu0
        %v525 = vpop.f32.mrb[0].mxu0
        %v526 = vadd.f32 %v320, %v525
        %v527 = vpop.f32.mrb[0].mxu0
        %528 = vmatprep.mubr.bf16.mxu0 0
        %529 = vmatmul.mubr.bf16.gmra.mrb[0].mxu0 %v425
        %v530 = vpop.f32.mrb[0].mxu0
        %v531 = vadd.f32 %v325, %v530
        %v532 = vpop.f32.mrb[0].mxu0
        %v533 = vpop.f32.mrb[0].mxu0
        %v534 = vadd.f32 %v330, %v533
        %v535 = vpop.f32.mrb[0].mxu0
        %536 = vmatprep.mubr.bf16.mxu0 0
        %537 = vmatmul.mubr.bf16.gmra.mrb[0].mxu0 %v426
        %v538 = vpop.f32.mrb[0].mxu0
        %v539 = vadd.f32 %v335, %v538
        %v540 = vpop.f32.mrb[0].mxu0
        %v541 = vpop.f32.mrb[0].mxu0
        %v542 = vadd.f32 %v340, %v541
        %v543 = vpop.f32.mrb[0].mxu0
        %544 = vmatprep.mubr.bf16.mxu0 0
        %545 = vmatmul.mubr.bf16.gmra.mrb[0].mxu0 %v427
        %v546 = vpop.f32.mrb[0].mxu0
        %v547 = vadd.f32 %v345, %v546
        %v548 = vpop.f32.mrb[0].mxu0
        %v549 = vpop.f32.mrb[0].mxu0
        %v550 = vadd.f32 %v350, %v549
        %v551 = vpop.f32.mrb[0].mxu0
        %552 = vmatprep.mubr.bf16.mxu0 0
        %553 = vmatmul.mubr.bf16.gmra.mrb[0].mxu0 %v428
        %v554 = vpop.f32.mrb[0].mxu0
        %v555 = vadd.f32 %v355, %v554
        %v556 = vpop.f32.mrb[0].mxu0
        %v557 = vpop.f32.mrb[0].mxu0
        %v558 = vadd.f32 %v360, %v557
        %v559 = vpop.f32.mrb[0].mxu0
        %560 = vmatprep.mubr.bf16.mxu0 0
        %561 = vmatmul.mubr.bf16.gmra.mrb[0].mxu0 %v429
        %v562 = vpop.f32.mrb[0].mxu0
        %v563 = vadd.f32 %v365, %v562
        %v564 = vpop.f32.mrb[0].mxu0
        %v565 = vpop.f32.mrb[0].mxu0
        %v566 = vadd.f32 %v370, %v565
        %v567 = vpop.f32.mrb[0].mxu0
        %568 = vmatprep.mubr.bf16.mxu0 0
        %569 = vmatmul.mubr.bf16.gmra.mrb[0].mxu0 %v430
        %v570 = vpop.f32.mrb[0].mxu0
        %v571 = vadd.f32 %v375, %v570
        %v572 = vpop.f32.mrb[0].mxu0
        %v573 = vpop.f32.mrb[0].mxu0
        %v574 = vadd.f32 %v380, %v573
        %v575 = vpop.f32.mrb[0].mxu0
        %576 = vmatprep.mubr.bf16.mxu0 0
        %577 = vmatmul.mubr.bf16.gmra.mrb[0].mxu0 %v431
        %v578 = vpop.f32.mrb[0].mxu0
        %v579 = vadd.f32 %v385, %v578
        %v580 = vpop.f32.mrb[0].mxu0
        %v581 = vpop.f32.mrb[0].mxu0
        %v582 = vadd.f32 %v390, %v581
        %v583 = vpop.f32.mrb[0].mxu0
        %584 = vdwg.mxu0
        %v585 = vmax.f32 %v523, 0.0
        %v586 = vmax.f32 %v526, 0.0
        %v587 = vmax.f32 %v531, 0.0
        %v588 = vmax.f32 %v534, 0.0
        %v589 = vmax.f32 %v539, 0.0
        %v590 = vmax.f32 %v542, 0.0
        %v591 = vmax.f32 %v547, 0.0
        %v592 = vmax.f32 %v550, 0.0
        %v593 = vmax.f32 %v555, 0.0
        %v594 = vmax.f32 %v558, 0.0
        %v595 = vmax.f32 %v563, 0.0
        %v596 = vmax.f32 %v566, 0.0
        %v597 = vmax.f32 %v571, 0.0
        %v598 = vmax.f32 %v574, 0.0
        %v599 = vmax.f32 %v579, 0.0
        %v600 = vmax.f32 %v582, 0.0
        %vm601 = vcmask 523264
        %v603 = vsel %vm601, %v585, 0
        %v606 = vsel %vm601, %v586, 0
        %v609 = vsel %vm601, %v587, 0
        %v612 = vsel %vm601, %v588, 0
        %v615 = vsel %vm601, %v589, 0
        %v618 = vsel %vm601, %v590, 0
        %v621 = vsel %vm601, %v591, 0
        %v624 = vsel %vm601, %v592, 0
        %v627 = vsel %vm601, %v593, 0
        %v630 = vsel %vm601, %v594, 0
        %v633 = vsel %vm601, %v595, 0
        %v636 = vsel %vm601, %v596, 0
        %v639 = vsel %vm601, %v597, 0
        %v642 = vsel %vm601, %v598, 0
        %v645 = vsel %vm601, %v599, 0
        %v648 = vsel %vm601, %v600, 0
        %650 = vmatprep.subr.mxu0 0.0
        %651 = vmatpush1.xpose.msra.mxu0 %v603
        %652 = vmatprep.subr.mxu0 0.0
        %653 = vmatpush1.xpose.msra.mxu0 %v606
        %654 = vmatprep.subr.mxu0 0.0
        %655 = vmatpush1.xpose.msra.mxu0 %v609
        %656 = vmatprep.subr.mxu0 0.0
        %657 = vmatpush1.xpose.msra.mxu0 %v612
        %658 = vmatprep.subr.mxu0 0.0
        %659 = vmatpush1.xpose.msra.mxu0 %v615
        %660 = vmatprep.subr.mxu0 0.0
        %661 = vmatpush1.xpose.msra.mxu0 %v618
        %662 = vmatprep.subr.mxu0 0.0
        %663 = vmatpush1.xpose.msra.mxu0 %v621
        %664 = vmatprep.subr.mxu0 0.0
        %665 = vmatpush1.xpose.msra.mxu0 %v624
        %666 = vmatprep.subr.mxu0 0.0
        %667 = vmatpush1.xpose.msra.mxu0 %v627
        %668 = vmatprep.subr.mxu0 0.0
        %669 = vmatpush1.xpose.msra.mxu0 %v630
        %670 = vmatprep.subr.mxu0 0.0
        %671 = vmatpush1.xpose.msra.mxu0 %v633
        %672 = vmatprep.subr.mxu0 0.0
        %673 = vmatpush1.xpose.msra.mxu0 %v636
        %674 = vmatprep.subr.mxu0 0.0
        %675 = vmatpush1.xpose.msra.mxu0 %v639
        %676 = vmatprep.subr.mxu0 0.0
        %677 = vmatpush1.xpose.msra.mxu0 %v642
        %678 = vmatprep.subr.mxu0 0.0
        %679 = vmatpush1.xpose.msra.mxu0 %v645
        %680 = vmatprep.subr.mxu0 0.0
        %681 = vmatpush1.xpose.msra.mxu0 %v648
        %682 = vmatprep.subr.mxu0 0.0
        %683 = vmatpush1.xpose.msra.mxu0 0.0
        %684 = vmatprep.subr.mxu0 0.0
        %685 = vmatpush1.xpose.msra.mxu0 0.0
        %686 = vmatprep.subr.mxu0 0.0
        %687 = vmatpush1.xpose.msra.mxu0 0.0
        %688 = vmatprep.subr.mxu0 0.0
        %689 = vmatpush1.xpose.msra.mxu0 0.0
        %690 = vmatprep.subr.mxu0 0.0
        %691 = vmatpush1.xpose.msra.mxu0 0.0
        %692 = vmatprep.subr.mxu0 0.0
        %693 = vmatpush1.xpose.msra.mxu0 0.0
        %694 = vmatprep.subr.mxu0 0.0
        %695 = vmatpush1.xpose.msra.mxu0 0.0
        %696 = vmatprep.subr.mxu0 0.0
        %697 = vmatpush1.xpose.msra.mxu0 0.0
        %698 = vmatprep.subr.mxu0 0.0
        %699 = vmatpush1.xpose.msra.mxu0 0.0
        %700 = vmatprep.subr.mxu0 0.0
        %701 = vmatpush1.xpose.msra.mxu0 0.0
        %702 = vmatprep.subr.mxu0 0.0
        %703 = vmatpush1.xpose.msra.mxu0 0.0
        %704 = vmatprep.subr.mxu0 0.0
        %705 = vmatpush1.xpose.msra.mxu0 0.0
        %706 = vmatprep.subr.mxu0 0.0
        %707 = vmatpush1.xpose.msra.mxu0 0.0
        %708 = vmatprep.subr.mxu0 0.0
        %709 = vmatpush1.xpose.msra.mxu0 0.0
        %710 = vmatprep.subr.mxu0 0.0
        %711 = vmatpush1.xpose.msra.mxu0 0.0
        %712 = vmatprep.subr.mxu0 0.0
        %713 = vmatpush1.xpose.msra.mxu0 0.0
        %714 = vmatprep.mubr.f32.mxu0 0.0
        %715 = vmatmul.mubr.f32.gmra.mrb[0].mxu0 %v603
        %v716 = vpop.f32.mrb[0].mxu0
        %v717 = vadd.f32 0.0, %v716
        %v718 = vpop.f32.mrb[0].mxu0
        %719 = vmatprep.mubr.f32.mxu0 0.0
        %720 = vmatmul.mubr.f32.gmra.mrb[0].mxu0 %v606
        %v721 = vpop.f32.mrb[0].mxu0
        %v722 = vadd.f32 0.0, %v721
        %v723 = vpop.f32.mrb[0].mxu0
        %724 = vmatprep.mubr.f32.mxu0 0.0
        %725 = vmatmul.mubr.f32.gmra.mrb[0].mxu0 %v609
        %v726 = vpop.f32.mrb[0].mxu0
        %v727 = vadd.f32 0.0, %v726
        %v728 = vpop.f32.mrb[0].mxu0
        %729 = vmatprep.mubr.f32.mxu0 0.0
        %730 = vmatmul.mubr.f32.gmra.mrb[0].mxu0 %v612
        %v731 = vpop.f32.mrb[0].mxu0
        %v732 = vadd.f32 0.0, %v731
        %v733 = vpop.f32.mrb[0].mxu0
        %734 = vmatprep.mubr.f32.mxu0 0.0
        %735 = vmatmul.mubr.f32.gmra.mrb[0].mxu0 %v615
        %v736 = vpop.f32.mrb[0].mxu0
        %v737 = vadd.f32 0.0, %v736
        %v738 = vpop.f32.mrb[0].mxu0
        %739 = vmatprep.mubr.f32.mxu0 0.0
        %740 = vmatmul.mubr.f32.gmra.mrb[0].mxu0 %v618
        %v741 = vpop.f32.mrb[0].mxu0
        %v742 = vadd.f32 0.0, %v741
        %v743 = vpop.f32.mrb[0].mxu0
        %744 = vmatprep.mubr.f32.mxu0 0.0
        %745 = vmatmul.mubr.f32.gmra.mrb[0].mxu0 %v621
        %v746 = vpop.f32.mrb[0].mxu0
        %v747 = vadd.f32 0.0, %v746
        %v748 = vpop.f32.mrb[0].mxu0
        %749 = vmatprep.mubr.f32.mxu0 0.0
        %750 = vmatmul.mubr.f32.gmra.mrb[0].mxu0 %v624
        %v751 = vpop.f32.mrb[0].mxu0
        %v752 = vadd.f32 0.0, %v751
        %v753 = vpop.f32.mrb[0].mxu0
        %754 = vmatprep.mubr.f32.mxu0 0.0
        %755 = vmatmul.mubr.f32.gmra.mrb[0].mxu0 %v627
        %v756 = vpop.f32.mrb[0].mxu0
        %v757 = vadd.f32 0.0, %v756
        %v758 = vpop.f32.mrb[0].mxu0
        %759 = vmatprep.mubr.f32.mxu0 0.0
        %760 = vmatmul.mubr.f32.gmra.mrb[0].mxu0 %v630
        %v761 = vpop.f32.mrb[0].mxu0
        %v762 = vadd.f32 0.0, %v761
        %v763 = vpop.f32.mrb[0].mxu0
        %764 = vmatprep.mubr.f32.mxu0 0.0
        %765 = vmatmul.mubr.f32.gmra.mrb[0].mxu0 %v633
        %v766 = vpop.f32.mrb[0].mxu0
        %v767 = vadd.f32 0.0, %v766
        %v768 = vpop.f32.mrb[0].mxu0
        %769 = vmatprep.mubr.f32.mxu0 0.0
        %770 = vmatmul.mubr.f32.gmra.mrb[0].mxu0 %v636
        %v771 = vpop.f32.mrb[0].mxu0
        %v772 = vadd.f32 0.0, %v771
        %v773 = vpop.f32.mrb[0].mxu0
        %774 = vmatprep.mubr.f32.mxu0 0.0
        %775 = vmatmul.mubr.f32.gmra.mrb[0].mxu0 %v639
        %v776 = vpop.f32.mrb[0].mxu0
        %v777 = vadd.f32 0.0, %v776
        %v778 = vpop.f32.mrb[0].mxu0
        %779 = vmatprep.mubr.f32.mxu0 0.0
        %780 = vmatmul.mubr.f32.gmra.mrb[0].mxu0 %v642
        %v781 = vpop.f32.mrb[0].mxu0
        %v782 = vadd.f32 0.0, %v781
        %v783 = vpop.f32.mrb[0].mxu0
        %784 = vmatprep.mubr.f32.mxu0 0.0
        %785 = vmatmul.mubr.f32.gmra.mrb[0].mxu0 %v645
        %v786 = vpop.f32.mrb[0].mxu0
        %v787 = vadd.f32 0.0, %v786
        %v788 = vpop.f32.mrb[0].mxu0
        %789 = vmatprep.mubr.f32.mxu0 0.0
        %790 = vmatmul.mubr.f32.gmra.mrb[0].mxu0 %v648
        %v791 = vpop.f32.mrb[0].mxu0
        %v792 = vadd.f32 0.0, %v791
        %v793 = vpop.f32.mrb[0].mxu0
        %794 = vdwg.mxu0
        %v795 = vpack.c.bf16 %v722, %v717
        %v796 = vpack.c.bf16 %v732, %v727
        %v797 = vpack.c.bf16 %v742, %v737
        %v798 = vpack.c.bf16 %v752, %v747
        %v799 = vpack.c.bf16 %v762, %v757
        %v800 = vpack.c.bf16 %v772, %v767
        %v801 = vpack.c.bf16 %v782, %v777
        %v802 = vpack.c.bf16 %v792, %v787
        %v811 = vunpack.c.l.b16 %v795
        %v812 = vunpack.c.h.b16 %v795
        %v813 = vunpack.c.l.b16 %v796
        %v814 = vunpack.c.h.b16 %v796
        %v815 = vunpack.c.l.b16 %v797
        %v816 = vunpack.c.h.b16 %v797
        %v817 = vunpack.c.l.b16 %v798
        %v818 = vunpack.c.h.b16 %v798
        %v819 = vunpack.c.l.b16 %v799
        %v820 = vunpack.c.h.b16 %v799
        %v821 = vunpack.c.l.b16 %v800
        %v822 = vunpack.c.h.b16 %v800
        %v823 = vunpack.c.l.b16 %v801
        %v824 = vunpack.c.h.b16 %v801
        %v825 = vunpack.c.l.b16 %v802
        %v826 = vunpack.c.h.b16 %v802
        %v827 = vpack.c.b16 %v811, %v811
        %v828 = vpack.c.b16 %v812, %v812
        %v829 = vpack.c.b16 %v813, %v813
        %v830 = vpack.c.b16 %v814, %v814
        %v831 = vpack.c.b16 %v815, %v815
        %v832 = vpack.c.b16 %v816, %v816
        %v833 = vpack.c.b16 %v817, %v817
        %v834 = vpack.c.b16 %v818, %v818
        %v835 = vpack.c.b16 %v819, %v819
        %v836 = vpack.c.b16 %v820, %v820
        %v837 = vpack.c.b16 %v821, %v821
        %v838 = vpack.c.b16 %v822, %v822
        %v839 = vpack.c.b16 %v823, %v823
        %v840 = vpack.c.b16 %v824, %v824
        %v841 = vpack.c.b16 %v825, %v825
        %v842 = vpack.c.b16 %v826, %v826
        %859 = vst [vmem:[%s247] sm:$0xf] %v827
        %860 = vst [vmem:[%s247 + $0x4] sm:$0xf] %v828
        %861 = vst [vmem:[%s247 + $0x8] sm:$0xf] %v829
        %862 = vst [vmem:[%s247 + $0xc] sm:$0xf] %v830
        %863 = vst [vmem:[%s247 + $0x10] sm:$0xf] %v831
        %864 = vst [vmem:[%s247 + $0x14] sm:$0xf] %v832
        %865 = vst [vmem:[%s247 + $0x18] sm:$0xf] %v833
        %866 = vst [vmem:[%s247 + $0x1c] sm:$0xf] %v834
        %867 = vst [vmem:[%s247 + $0x20] sm:$0xf] %v835
        %868 = vst [vmem:[%s247 + $0x24] sm:$0xf] %v836
        %869 = vst [vmem:[%s247 + $0x28] sm:$0xf] %v837
        %870 = vst [vmem:[%s247 + $0x2c] sm:$0xf] %v838
        %871 = vst [vmem:[%s247 + $0x30] sm:$0xf] %v839
        %872 = vst [vmem:[%s247 + $0x34] sm:$0xf] %v840
        %873 = vst [vmem:[%s247 + $0x38] sm:$0xf] %v841
        %874 = vst [vmem:[%s247 + $0x3c] sm:$0xf] %v842
        %v875 = vld [vmem:[%s257] sm:$0xf]
        %v876 = vld [vmem:[%s257 + $0x4] sm:$0xf]
        %v877 = vld [vmem:[%s257 + $0x8] sm:$0xf]
        %v878 = vld [vmem:[%s257 + $0xc] sm:$0xf]
        %v879 = vld [vmem:[%s257 + $0x10] sm:$0xf]
        %v880 = vld [vmem:[%s257 + $0x14] sm:$0xf]
        %v881 = vld [vmem:[%s257 + $0x18] sm:$0xf]
        %v882 = vld [vmem:[%s257 + $0x1c] sm:$0xf]
        %v883 = vld [vmem:[%s257 + $0x20] sm:$0xf]
        %v884 = vld [vmem:[%s257 + $0x24] sm:$0xf]
        %v885 = vld [vmem:[%s257 + $0x28] sm:$0xf]
        %v886 = vld [vmem:[%s257 + $0x2c] sm:$0xf]
        %v887 = vld [vmem:[%s257 + $0x30] sm:$0xf]
        %v888 = vld [vmem:[%s257 + $0x34] sm:$0xf]
        %v889 = vld [vmem:[%s257 + $0x38] sm:$0xf]
        %v890 = vld [vmem:[%s257 + $0x3c] sm:$0xf]
        %s891 = scalar_lea.vmem %s3, 64
        %v892 = vld [vmem:[%s891] sm:$0xf]
        %v893 = vld [vmem:[%s891 + $0x4] sm:$0xf]
        %v894 = vld [vmem:[%s891 + $0x8] sm:$0xf]
        %v895 = vld [vmem:[%s891 + $0xc] sm:$0xf]
        %v896 = vld [vmem:[%s891 + $0x10] sm:$0xf]
        %v897 = vld [vmem:[%s891 + $0x14] sm:$0xf]
        %v898 = vld [vmem:[%s891 + $0x18] sm:$0xf]
        %v899 = vld [vmem:[%s891 + $0x1c] sm:$0xf]
        %v900 = vld [vmem:[%s891 + $0x20] sm:$0xf]
        %v901 = vld [vmem:[%s891 + $0x24] sm:$0xf]
        %v902 = vld [vmem:[%s891 + $0x28] sm:$0xf]
        %v903 = vld [vmem:[%s891 + $0x2c] sm:$0xf]
        %v904 = vld [vmem:[%s891 + $0x30] sm:$0xf]
        %v905 = vld [vmem:[%s891 + $0x34] sm:$0xf]
        %v906 = vld [vmem:[%s891 + $0x38] sm:$0xf]
        %v907 = vld [vmem:[%s891 + $0x3c] sm:$0xf]
        %s908 = scalar_lea.vmem %s4, 128
        %v909 = vld [vmem:[%s908] sm:$0xff]
        %v910 = vld [vmem:[%s908 + $0x8] sm:$0xff]
        %v911 = vld [vmem:[%s908 + $0x10] sm:$0xff]
        %v912 = vld [vmem:[%s908 + $0x18] sm:$0xff]
        %v913 = vld [vmem:[%s908 + $0x20] sm:$0xff]
        %v914 = vld [vmem:[%s908 + $0x28] sm:$0xff]
        %v915 = vld [vmem:[%s908 + $0x30] sm:$0xff]
        %v916 = vld [vmem:[%s908 + $0x38] sm:$0xff]
        %v917 = vld [vmem:[%s908 + $0x40] sm:$0xff]
        %v918 = vld [vmem:[%s908 + $0x48] sm:$0xff]
        %v919 = vld [vmem:[%s908 + $0x50] sm:$0xff]
        %v920 = vld [vmem:[%s908 + $0x58] sm:$0xff]
        %v921 = vld [vmem:[%s908 + $0x60] sm:$0xff]
        %v922 = vld [vmem:[%s908 + $0x68] sm:$0xff]
        %v923 = vld [vmem:[%s908 + $0x70] sm:$0xff]
        %v924 = vld [vmem:[%s908 + $0x78] sm:$0xff]
        %926 = vset.pattern.permute.xlu0 0
        %927 = vperm.xlu0 %926, %v909
        %v928 = vpop.permute.xlu0 %927
        %931 = vset.pattern.permute.xlu0 0
        %932 = vperm.xlu0 %931, %v910
        %v933 = vpop.permute.xlu0 %932
        %936 = vset.pattern.permute.xlu0 0
        %937 = vperm.xlu0 %936, %v911
        %v938 = vpop.permute.xlu0 %937
        %941 = vset.pattern.permute.xlu0 0
        %942 = vperm.xlu0 %941, %v912
        %v943 = vpop.permute.xlu0 %942
        %946 = vset.pattern.permute.xlu0 0
        %947 = vperm.xlu0 %946, %v913
        %v948 = vpop.permute.xlu0 %947
        %951 = vset.pattern.permute.xlu0 0
        %952 = vperm.xlu0 %951, %v914
        %v953 = vpop.permute.xlu0 %952
        %956 = vset.pattern.permute.xlu0 0
        %957 = vperm.xlu0 %956, %v915
        %v958 = vpop.permute.xlu0 %957
        %961 = vset.pattern.permute.xlu0 0
        %962 = vperm.xlu0 %961, %v916
        %v963 = vpop.permute.xlu0 %962
        %966 = vset.pattern.permute.xlu0 0
        %967 = vperm.xlu0 %966, %v917
        %v968 = vpop.permute.xlu0 %967
        %971 = vset.pattern.permute.xlu0 0
        %972 = vperm.xlu0 %971, %v918
        %v973 = vpop.permute.xlu0 %972
        %976 = vset.pattern.permute.xlu0 0
        %977 = vperm.xlu0 %976, %v919
        %v978 = vpop.permute.xlu0 %977
        %981 = vset.pattern.permute.xlu0 0
        %982 = vperm.xlu0 %981, %v920
        %v983 = vpop.permute.xlu0 %982
        %986 = vset.pattern.permute.xlu0 0
        %987 = vperm.xlu0 %986, %v921
        %v988 = vpop.permute.xlu0 %987
        %991 = vset.pattern.permute.xlu0 0
        %992 = vperm.xlu0 %991, %v922
        %v993 = vpop.permute.xlu0 %992
        %996 = vset.pattern.permute.xlu0 0
        %997 = vperm.xlu0 %996, %v923
        %v998 = vpop.permute.xlu0 %997
        %1001 = vset.pattern.permute.xlu0 0
        %1002 = vperm.xlu0 %1001, %v924
        %v1003 = vpop.permute.xlu0 %1002
        %v1021 = vunpack.c.l.b16 %v892
        %v1022 = vunpack.c.l.b16 %v893
        %v1023 = vunpack.c.l.b16 %v894
        %v1024 = vunpack.c.l.b16 %v895
        %v1025 = vunpack.c.l.b16 %v896
        %v1026 = vunpack.c.l.b16 %v897
        %v1027 = vunpack.c.l.b16 %v898
        %v1028 = vunpack.c.l.b16 %v899
        %v1029 = vunpack.c.l.b16 %v900
        %v1030 = vunpack.c.l.b16 %v901
        %v1031 = vunpack.c.l.b16 %v902
        %v1032 = vunpack.c.l.b16 %v903
        %v1033 = vunpack.c.l.b16 %v904
        %v1034 = vunpack.c.l.b16 %v905
        %v1035 = vunpack.c.l.b16 %v906
        %v1036 = vunpack.c.l.b16 %v907
        %v1037 = vpack.c.b16 %v1022, %v1021
        %v1038 = vpack.c.b16 %v1024, %v1023
        %v1039 = vpack.c.b16 %v1026, %v1025
        %v1040 = vpack.c.b16 %v1028, %v1027
        %v1041 = vpack.c.b16 %v1030, %v1029
        %v1042 = vpack.c.b16 %v1032, %v1031
        %v1043 = vpack.c.b16 %v1034, %v1033
        %v1044 = vpack.c.b16 %v1036, %v1035
        %v1069 = vunpack.c.l.b16 %v875
        %v1070 = vunpack.c.l.b16 %v876
        %v1071 = vunpack.c.l.b16 %v877
        %v1072 = vunpack.c.l.b16 %v878
        %v1073 = vunpack.c.l.b16 %v879
        %v1074 = vunpack.c.l.b16 %v880
        %v1075 = vunpack.c.l.b16 %v881
        %v1076 = vunpack.c.l.b16 %v882
        %v1077 = vunpack.c.l.b16 %v883
        %v1078 = vunpack.c.l.b16 %v884
        %v1079 = vunpack.c.l.b16 %v885
        %v1080 = vunpack.c.l.b16 %v886
        %v1081 = vunpack.c.l.b16 %v887
        %v1082 = vunpack.c.l.b16 %v888
        %v1083 = vunpack.c.l.b16 %v889
        %v1084 = vunpack.c.l.b16 %v890
        %v1085 = vpack.c.b16 %v1070, %v1069
        %v1086 = vpack.c.b16 %v1072, %v1071
        %v1087 = vpack.c.b16 %v1074, %v1073
        %v1088 = vpack.c.b16 %v1076, %v1075
        %v1089 = vpack.c.b16 %v1078, %v1077
        %v1090 = vpack.c.b16 %v1080, %v1079
        %v1091 = vpack.c.b16 %v1082, %v1081
        %v1092 = vpack.c.b16 %v1084, %v1083
        %1101 = vmatprep.subr.bf16.mxu0 0
        %1102 = vmatpush1.bf16.msra.mxu0 %v1085
        %1103 = vmatprep.subr.bf16.mxu0 0
        %1104 = vmatpush1.bf16.msra.mxu0 %v1086
        %1105 = vmatprep.subr.bf16.mxu0 0
        %1106 = vmatpush1.bf16.msra.mxu0 %v1087
        %1107 = vmatprep.subr.bf16.mxu0 0
        %1108 = vmatpush1.bf16.msra.mxu0 %v1088
        %1109 = vmatprep.subr.bf16.mxu0 0
        %1110 = vmatpush1.bf16.msra.mxu0 %v1089
        %1111 = vmatprep.subr.bf16.mxu0 0
        %1112 = vmatpush1.bf16.msra.mxu0 %v1090
        %1113 = vmatprep.subr.bf16.mxu0 0
        %1114 = vmatpush1.bf16.msra.mxu0 %v1091
        %1115 = vmatprep.subr.bf16.mxu0 0
        %1116 = vmatpush1.bf16.msra.mxu0 %v1092
        %1117 = vmatprep.subr.bf16.mxu0 0
        %1118 = vmatpush1.bf16.msra.mxu0 0
        %1119 = vmatprep.subr.bf16.mxu0 0
        %1120 = vmatpush1.bf16.msra.mxu0 0
        %1121 = vmatprep.subr.bf16.mxu0 0
        %1122 = vmatpush1.bf16.msra.mxu0 0
        %1123 = vmatprep.subr.bf16.mxu0 0
        %1124 = vmatpush1.bf16.msra.mxu0 0
        %1125 = vmatprep.subr.bf16.mxu0 0
        %1126 = vmatpush1.bf16.msra.mxu0 0
        %1127 = vmatprep.subr.bf16.mxu0 0
        %1128 = vmatpush1.bf16.msra.mxu0 0
        %1129 = vmatprep.subr.bf16.mxu0 0
        %1130 = vmatpush1.bf16.msra.mxu0 0
        %1131 = vmatprep.subr.bf16.mxu0 0
        %1132 = vmatpush1.bf16.msra.mxu0 0
        %1133 = vmatprep.mubr.bf16.mxu0 0
        %1134 = vmatmul.mubr.bf16.gmra.mrb[0].mxu0 %v1037
        %v1135 = vpop.f32.mrb[0].mxu0
        %v1136 = vadd.f32 %v928, %v1135
        %v1137 = vpop.f32.mrb[0].mxu0
        %v1138 = vpop.f32.mrb[0].mxu0
        %v1139 = vadd.f32 %v933, %v1138
        %v1140 = vpop.f32.mrb[0].mxu0
        %1141 = vmatprep.mubr.bf16.mxu0 0
        %1142 = vmatmul.mubr.bf16.gmra.mrb[0].mxu0 %v1038
        %v1143 = vpop.f32.mrb[0].mxu0
        %v1144 = vadd.f32 %v938, %v1143
        %v1145 = vpop.f32.mrb[0].mxu0
        %v1146 = vpop.f32.mrb[0].mxu0
        %v1147 = vadd.f32 %v943, %v1146
        %v1148 = vpop.f32.mrb[0].mxu0
        %1149 = vmatprep.mubr.bf16.mxu0 0
        %1150 = vmatmul.mubr.bf16.gmra.mrb[0].mxu0 %v1039
        %v1151 = vpop.f32.mrb[0].mxu0
        %v1152 = vadd.f32 %v948, %v1151
        %v1153 = vpop.f32.mrb[0].mxu0
        %v1154 = vpop.f32.mrb[0].mxu0
        %v1155 = vadd.f32 %v953, %v1154
        %v1156 = vpop.f32.mrb[0].mxu0
        %1157 = vmatprep.mubr.bf16.mxu0 0
        %1158 = vmatmul.mubr.bf16.gmra.mrb[0].mxu0 %v1040
        %v1159 = vpop.f32.mrb[0].mxu0
        %v1160 = vadd.f32 %v958, %v1159
        %v1161 = vpop.f32.mrb[0].mxu0
        %v1162 = vpop.f32.mrb[0].mxu0
        %v1163 = vadd.f32 %v963, %v1162
        %v1164 = vpop.f32.mrb[0].mxu0
        %1165 = vmatprep.mubr.bf16.mxu0 0
        %1166 = vmatmul.mubr.bf16.gmra.mrb[0].mxu0 %v1041
        %v1167 = vpop.f32.mrb[0].mxu0
        %v1168 = vadd.f32 %v968, %v1167
        %v1169 = vpop.f32.mrb[0].mxu0
        %v1170 = vpop.f32.mrb[0].mxu0
        %v1171 = vadd.f32 %v973, %v1170
        %v1172 = vpop.f32.mrb[0].mxu0
        %1173 = vmatprep.mubr.bf16.mxu0 0
        %1174 = vmatmul.mubr.bf16.gmra.mrb[0].mxu0 %v1042
        %v1175 = vpop.f32.mrb[0].mxu0
        %v1176 = vadd.f32 %v978, %v1175
        %v1177 = vpop.f32.mrb[0].mxu0
        %v1178 = vpop.f32.mrb[0].mxu0
        %v1179 = vadd.f32 %v983, %v1178
        %v1180 = vpop.f32.mrb[0].mxu0
        %1181 = vmatprep.mubr.bf16.mxu0 0
        %1182 = vmatmul.mubr.bf16.gmra.mrb[0].mxu0 %v1043
        %v1183 = vpop.f32.mrb[0].mxu0
        %v1184 = vadd.f32 %v988, %v1183
        %v1185 = vpop.f32.mrb[0].mxu0
        %v1186 = vpop.f32.mrb[0].mxu0
        %v1187 = vadd.f32 %v993, %v1186
        %v1188 = vpop.f32.mrb[0].mxu0
        %1189 = vmatprep.mubr.bf16.mxu0 0
        %1190 = vmatmul.mubr.bf16.gmra.mrb[0].mxu0 %v1044
        %v1191 = vpop.f32.mrb[0].mxu0
        %v1192 = vadd.f32 %v998, %v1191
        %v1193 = vpop.f32.mrb[0].mxu0
        %v1194 = vpop.f32.mrb[0].mxu0
        %v1195 = vadd.f32 %v1003, %v1194
        %v1196 = vpop.f32.mrb[0].mxu0
        %1197 = vdwg.mxu0
        %v1198 = vmax.f32 %v1136, 0.0
        %v1199 = vmax.f32 %v1139, 0.0
        %v1200 = vmax.f32 %v1144, 0.0
        %v1201 = vmax.f32 %v1147, 0.0
        %v1202 = vmax.f32 %v1152, 0.0
        %v1203 = vmax.f32 %v1155, 0.0
        %v1204 = vmax.f32 %v1160, 0.0
        %v1205 = vmax.f32 %v1163, 0.0
        %v1206 = vmax.f32 %v1168, 0.0
        %v1207 = vmax.f32 %v1171, 0.0
        %v1208 = vmax.f32 %v1176, 0.0
        %v1209 = vmax.f32 %v1179, 0.0
        %v1210 = vmax.f32 %v1184, 0.0
        %v1211 = vmax.f32 %v1187, 0.0
        %v1212 = vmax.f32 %v1192, 0.0
        %v1213 = vmax.f32 %v1195, 0.0
        %v1215 = vsel %vm601, %v1198, 0
        %v1218 = vsel %vm601, %v1199, 0
        %v1221 = vsel %vm601, %v1200, 0
        %v1224 = vsel %vm601, %v1201, 0
        %v1227 = vsel %vm601, %v1202, 0
        %v1230 = vsel %vm601, %v1203, 0
        %v1233 = vsel %vm601, %v1204, 0
        %v1236 = vsel %vm601, %v1205, 0
        %v1239 = vsel %vm601, %v1206, 0
        %v1242 = vsel %vm601, %v1207, 0
        %v1245 = vsel %vm601, %v1208, 0
        %v1248 = vsel %vm601, %v1209, 0
        %v1251 = vsel %vm601, %v1210, 0
        %v1254 = vsel %vm601, %v1211, 0
        %v1257 = vsel %vm601, %v1212, 0
        %v1260 = vsel %vm601, %v1213, 0
        %1262 = vmatprep.subr.mxu0 0.0
        %1263 = vmatpush1.xpose.msra.mxu0 %v1215
        %1264 = vmatprep.subr.mxu0 0.0
        %1265 = vmatpush1.xpose.msra.mxu0 %v1218
        %1266 = vmatprep.subr.mxu0 0.0
        %1267 = vmatpush1.xpose.msra.mxu0 %v1221
        %1268 = vmatprep.subr.mxu0 0.0
        %1269 = vmatpush1.xpose.msra.mxu0 %v1224
        %1270 = vmatprep.subr.mxu0 0.0
        %1271 = vmatpush1.xpose.msra.mxu0 %v1227
        %1272 = vmatprep.subr.mxu0 0.0
        %1273 = vmatpush1.xpose.msra.mxu0 %v1230
        %1274 = vmatprep.subr.mxu0 0.0
        %1275 = vmatpush1.xpose.msra.mxu0 %v1233
        %1276 = vmatprep.subr.mxu0 0.0
        %1277 = vmatpush1.xpose.msra.mxu0 %v1236
        %1278 = vmatprep.subr.mxu0 0.0
        %1279 = vmatpush1.xpose.msra.mxu0 %v1239
        %1280 = vmatprep.subr.mxu0 0.0
        %1281 = vmatpush1.xpose.msra.mxu0 %v1242
        %1282 = vmatprep.subr.mxu0 0.0
        %1283 = vmatpush1.xpose.msra.mxu0 %v1245
        %1284 = vmatprep.subr.mxu0 0.0
        %1285 = vmatpush1.xpose.msra.mxu0 %v1248
        %1286 = vmatprep.subr.mxu0 0.0
        %1287 = vmatpush1.xpose.msra.mxu0 %v1251
        %1288 = vmatprep.subr.mxu0 0.0
        %1289 = vmatpush1.xpose.msra.mxu0 %v1254
        %1290 = vmatprep.subr.mxu0 0.0
        %1291 = vmatpush1.xpose.msra.mxu0 %v1257
        %1292 = vmatprep.subr.mxu0 0.0
        %1293 = vmatpush1.xpose.msra.mxu0 %v1260
        %1294 = vmatprep.subr.mxu0 0.0
        %1295 = vmatpush1.xpose.msra.mxu0 0.0
        %1296 = vmatprep.subr.mxu0 0.0
        %1297 = vmatpush1.xpose.msra.mxu0 0.0
        %1298 = vmatprep.subr.mxu0 0.0
        %1299 = vmatpush1.xpose.msra.mxu0 0.0
        %1300 = vmatprep.subr.mxu0 0.0
        %1301 = vmatpush1.xpose.msra.mxu0 0.0
        %1302 = vmatprep.subr.mxu0 0.0
        %1303 = vmatpush1.xpose.msra.mxu0 0.0
        %1304 = vmatprep.subr.mxu0 0.0
        %1305 = vmatpush1.xpose.msra.mxu0 0.0
        %1306 = vmatprep.subr.mxu0 0.0
        %1307 = vmatpush1.xpose.msra.mxu0 0.0
        %1308 = vmatprep.subr.mxu0 0.0
        %1309 = vmatpush1.xpose.msra.mxu0 0.0
        %1310 = vmatprep.subr.mxu0 0.0
        %1311 = vmatpush1.xpose.msra.mxu0 0.0
        %1312 = vmatprep.subr.mxu0 0.0
        %1313 = vmatpush1.xpose.msra.mxu0 0.0
        %1314 = vmatprep.subr.mxu0 0.0
        %1315 = vmatpush1.xpose.msra.mxu0 0.0
        %1316 = vmatprep.subr.mxu0 0.0
        %1317 = vmatpush1.xpose.msra.mxu0 0.0
        %1318 = vmatprep.subr.mxu0 0.0
        %1319 = vmatpush1.xpose.msra.mxu0 0.0
        %1320 = vmatprep.subr.mxu0 0.0
        %1321 = vmatpush1.xpose.msra.mxu0 0.0
        %1322 = vmatprep.subr.mxu0 0.0
        %1323 = vmatpush1.xpose.msra.mxu0 0.0
        %1324 = vmatprep.subr.mxu0 0.0
        %1325 = vmatpush1.xpose.msra.mxu0 0.0
        %1326 = vmatprep.mubr.f32.mxu0 0.0
        %1327 = vmatmul.mubr.f32.gmra.mrb[0].mxu0 %v1215
        %v1328 = vpop.f32.mrb[0].mxu0
        %v1329 = vadd.f32 0.0, %v1328
        %v1330 = vpop.f32.mrb[0].mxu0
        %1331 = vmatprep.mubr.f32.mxu0 0.0
        %1332 = vmatmul.mubr.f32.gmra.mrb[0].mxu0 %v1218
        %v1333 = vpop.f32.mrb[0].mxu0
        %v1334 = vadd.f32 0.0, %v1333
        %v1335 = vpop.f32.mrb[0].mxu0
        %1336 = vmatprep.mubr.f32.mxu0 0.0
        %1337 = vmatmul.mubr.f32.gmra.mrb[0].mxu0 %v1221
        %v1338 = vpop.f32.mrb[0].mxu0
        %v1339 = vadd.f32 0.0, %v1338
        %v1340 = vpop.f32.mrb[0].mxu0
        %1341 = vmatprep.mubr.f32.mxu0 0.0
        %1342 = vmatmul.mubr.f32.gmra.mrb[0].mxu0 %v1224
        %v1343 = vpop.f32.mrb[0].mxu0
        %v1344 = vadd.f32 0.0, %v1343
        %v1345 = vpop.f32.mrb[0].mxu0
        %1346 = vmatprep.mubr.f32.mxu0 0.0
        %1347 = vmatmul.mubr.f32.gmra.mrb[0].mxu0 %v1227
        %v1348 = vpop.f32.mrb[0].mxu0
        %v1349 = vadd.f32 0.0, %v1348
        %v1350 = vpop.f32.mrb[0].mxu0
        %1351 = vmatprep.mubr.f32.mxu0 0.0
        %1352 = vmatmul.mubr.f32.gmra.mrb[0].mxu0 %v1230
        %v1353 = vpop.f32.mrb[0].mxu0
        %v1354 = vadd.f32 0.0, %v1353
        %v1355 = vpop.f32.mrb[0].mxu0
        %1356 = vmatprep.mubr.f32.mxu0 0.0
        %1357 = vmatmul.mubr.f32.gmra.mrb[0].mxu0 %v1233
        %v1358 = vpop.f32.mrb[0].mxu0
        %v1359 = vadd.f32 0.0, %v1358
        %v1360 = vpop.f32.mrb[0].mxu0
        %1361 = vmatprep.mubr.f32.mxu0 0.0
        %1362 = vmatmul.mubr.f32.gmra.mrb[0].mxu0 %v1236
        %v1363 = vpop.f32.mrb[0].mxu0
        %v1364 = vadd.f32 0.0, %v1363
        %v1365 = vpop.f32.mrb[0].mxu0
        %1366 = vmatprep.mubr.f32.mxu0 0.0
        %1367 = vmatmul.mubr.f32.gmra.mrb[0].mxu0 %v1239
        %v1368 = vpop.f32.mrb[0].mxu0
        %v1369 = vadd.f32 0.0, %v1368
        %v1370 = vpop.f32.mrb[0].mxu0
        %1371 = vmatprep.mubr.f32.mxu0 0.0
        %1372 = vmatmul.mubr.f32.gmra.mrb[0].mxu0 %v1242
        %v1373 = vpop.f32.mrb[0].mxu0
        %v1374 = vadd.f32 0.0, %v1373
        %v1375 = vpop.f32.mrb[0].mxu0
        %1376 = vmatprep.mubr.f32.mxu0 0.0
        %1377 = vmatmul.mubr.f32.gmra.mrb[0].mxu0 %v1245
        %v1378 = vpop.f32.mrb[0].mxu0
        %v1379 = vadd.f32 0.0, %v1378
        %v1380 = vpop.f32.mrb[0].mxu0
        %1381 = vmatprep.mubr.f32.mxu0 0.0
        %1382 = vmatmul.mubr.f32.gmra.mrb[0].mxu0 %v1248
        %v1383 = vpop.f32.mrb[0].mxu0
        %v1384 = vadd.f32 0.0, %v1383
        %v1385 = vpop.f32.mrb[0].mxu0
        %1386 = vmatprep.mubr.f32.mxu0 0.0
        %1387 = vmatmul.mubr.f32.gmra.mrb[0].mxu0 %v1251
        %v1388 = vpop.f32.mrb[0].mxu0
        %v1389 = vadd.f32 0.0, %v1388
        %v1390 = vpop.f32.mrb[0].mxu0
        %1391 = vmatprep.mubr.f32.mxu0 0.0
        %1392 = vmatmul.mubr.f32.gmra.mrb[0].mxu0 %v1254
        %v1393 = vpop.f32.mrb[0].mxu0
        %v1394 = vadd.f32 0.0, %v1393
        %v1395 = vpop.f32.mrb[0].mxu0
        %1396 = vmatprep.mubr.f32.mxu0 0.0
        %1397 = vmatmul.mubr.f32.gmra.mrb[0].mxu0 %v1257
        %v1398 = vpop.f32.mrb[0].mxu0
        %v1399 = vadd.f32 0.0, %v1398
        %v1400 = vpop.f32.mrb[0].mxu0
        %1401 = vmatprep.mubr.f32.mxu0 0.0
        %1402 = vmatmul.mubr.f32.gmra.mrb[0].mxu0 %v1260
        %v1403 = vpop.f32.mrb[0].mxu0
        %v1404 = vadd.f32 0.0, %v1403
        %v1405 = vpop.f32.mrb[0].mxu0
        %1406 = vdwg.mxu0
        %v1407 = vpack.c.bf16 %v1334, %v1329
        %v1408 = vpack.c.bf16 %v1344, %v1339
        %v1409 = vpack.c.bf16 %v1354, %v1349
        %v1410 = vpack.c.bf16 %v1364, %v1359
        %v1411 = vpack.c.bf16 %v1374, %v1369
        %v1412 = vpack.c.bf16 %v1384, %v1379
        %v1413 = vpack.c.bf16 %v1394, %v1389
        %v1414 = vpack.c.bf16 %v1404, %v1399
        %v1423 = vunpack.c.l.b16 %v1407
        %v1424 = vunpack.c.h.b16 %v1407
        %v1425 = vunpack.c.l.b16 %v1408
        %v1426 = vunpack.c.h.b16 %v1408
        %v1427 = vunpack.c.l.b16 %v1409
        %v1428 = vunpack.c.h.b16 %v1409
        %v1429 = vunpack.c.l.b16 %v1410
        %v1430 = vunpack.c.h.b16 %v1410
        %v1431 = vunpack.c.l.b16 %v1411
        %v1432 = vunpack.c.h.b16 %v1411
        %v1433 = vunpack.c.l.b16 %v1412
        %v1434 = vunpack.c.h.b16 %v1412
        %v1435 = vunpack.c.l.b16 %v1413
        %v1436 = vunpack.c.h.b16 %v1413
        %v1437 = vunpack.c.l.b16 %v1414
        %v1438 = vunpack.c.h.b16 %v1414
        %v1439 = vpack.c.b16 %v1423, %v1423
        %v1440 = vpack.c.b16 %v1424, %v1424
        %v1441 = vpack.c.b16 %v1425, %v1425
        %v1442 = vpack.c.b16 %v1426, %v1426
        %v1443 = vpack.c.b16 %v1427, %v1427
        %v1444 = vpack.c.b16 %v1428, %v1428
        %v1445 = vpack.c.b16 %v1429, %v1429
        %v1446 = vpack.c.b16 %v1430, %v1430
        %v1447 = vpack.c.b16 %v1431, %v1431
        %v1448 = vpack.c.b16 %v1432, %v1432
        %v1449 = vpack.c.b16 %v1433, %v1433
        %v1450 = vpack.c.b16 %v1434, %v1434
        %v1451 = vpack.c.b16 %v1435, %v1435
        %v1452 = vpack.c.b16 %v1436, %v1436
        %v1453 = vpack.c.b16 %v1437, %v1437
        %v1454 = vpack.c.b16 %v1438, %v1438
        %s1471 = scalar_lea.vmem %s247, 64 [#allocation2]
        %1472 = vst [vmem:[%s1471] sm:$0xf] %v1439
        %1473 = vst [vmem:[%s1471 + $0x4] sm:$0xf] %v1440
        %1474 = vst [vmem:[%s1471 + $0x8] sm:$0xf] %v1441
        %1475 = vst [vmem:[%s1471 + $0xc] sm:$0xf] %v1442
        %1476 = vst [vmem:[%s1471 + $0x10] sm:$0xf] %v1443
        %1477 = vst [vmem:[%s1471 + $0x14] sm:$0xf] %v1444
        %1478 = vst [vmem:[%s1471 + $0x18] sm:$0xf] %v1445
        %1479 = vst [vmem:[%s1471 + $0x1c] sm:$0xf] %v1446
        %1480 = vst [vmem:[%s1471 + $0x20] sm:$0xf] %v1447
        %1481 = vst [vmem:[%s1471 + $0x24] sm:$0xf] %v1448
        %1482 = vst [vmem:[%s1471 + $0x28] sm:$0xf] %v1449
        %1483 = vst [vmem:[%s1471 + $0x2c] sm:$0xf] %v1450
        %1484 = vst [vmem:[%s1471 + $0x30] sm:$0xf] %v1451
        %1485 = vst [vmem:[%s1471 + $0x34] sm:$0xf] %v1452
        %1486 = vst [vmem:[%s1471 + $0x38] sm:$0xf] %v1453
        %1487 = vst [vmem:[%s1471 + $0x3c] sm:$0xf] %v1454
        %v1488 = vld [vmem:[%s262] sm:$0xf]
        %v1489 = vld [vmem:[%s262 + $0x4] sm:$0xf]
        %v1490 = vld [vmem:[%s262 + $0x8] sm:$0xf]
        %v1491 = vld [vmem:[%s262 + $0xc] sm:$0xf]
        %v1492 = vld [vmem:[%s262 + $0x10] sm:$0xf]
        %v1493 = vld [vmem:[%s262 + $0x14] sm:$0xf]
        %v1494 = vld [vmem:[%s262 + $0x18] sm:$0xf]
        %v1495 = vld [vmem:[%s262 + $0x1c] sm:$0xf]
        %v1496 = vld [vmem:[%s262 + $0x20] sm:$0xf]
        %v1497 = vld [vmem:[%s262 + $0x24] sm:$0xf]
        %v1498 = vld [vmem:[%s262 + $0x28] sm:$0xf]
        %v1499 = vld [vmem:[%s262 + $0x2c] sm:$0xf]
        %v1500 = vld [vmem:[%s262 + $0x30] sm:$0xf]
        %v1501 = vld [vmem:[%s262 + $0x34] sm:$0xf]
        %v1502 = vld [vmem:[%s262 + $0x38] sm:$0xf]
        %v1503 = vld [vmem:[%s262 + $0x3c] sm:$0xf]
        %s1504 = scalar_lea.vmem %s3, 128
        %v1505 = vld [vmem:[%s1504] sm:$0xf]
        %v1506 = vld [vmem:[%s1504 + $0x4] sm:$0xf]
        %v1507 = vld [vmem:[%s1504 + $0x8] sm:$0xf]
        %v1508 = vld [vmem:[%s1504 + $0xc] sm:$0xf]
        %v1509 = vld [vmem:[%s1504 + $0x10] sm:$0xf]
        %v1510 = vld [vmem:[%s1504 + $0x14] sm:$0xf]
        %v1511 = vld [vmem:[%s1504 + $0x18] sm:$0xf]
        %v1512 = vld [vmem:[%s1504 + $0x1c] sm:$0xf]
        %v1513 = vld [vmem:[%s1504 + $0x20] sm:$0xf]
        %v1514 = vld [vmem:[%s1504 + $0x24] sm:$0xf]
        %v1515 = vld [vmem:[%s1504 + $0x28] sm:$0xf]
        %v1516 = vld [vmem:[%s1504 + $0x2c] sm:$0xf]
        %v1517 = vld [vmem:[%s1504 + $0x30] sm:$0xf]
        %v1518 = vld [vmem:[%s1504 + $0x34] sm:$0xf]
        %v1519 = vld [vmem:[%s1504 + $0x38] sm:$0xf]
        %v1520 = vld [vmem:[%s1504 + $0x3c] sm:$0xf]
        %s1521 = scalar_lea.vmem %s4, 256
        %v1522 = vld [vmem:[%s1521] sm:$0xff]
        %v1523 = vld [vmem:[%s1521 + $0x8] sm:$0xff]
        %v1524 = vld [vmem:[%s1521 + $0x10] sm:$0xff]
        %v1525 = vld [vmem:[%s1521 + $0x18] sm:$0xff]
        %v1526 = vld [vmem:[%s1521 + $0x20] sm:$0xff]
        %v1527 = vld [vmem:[%s1521 + $0x28] sm:$0xff]
        %v1528 = vld [vmem:[%s1521 + $0x30] sm:$0xff]
        %v1529 = vld [vmem:[%s1521 + $0x38] sm:$0xff]
        %v1530 = vld [vmem:[%s1521 + $0x40] sm:$0xff]
        %v1531 = vld [vmem:[%s1521 + $0x48] sm:$0xff]
        %v1532 = vld [vmem:[%s1521 + $0x50] sm:$0xff]
        %v1533 = vld [vmem:[%s1521 + $0x58] sm:$0xff]
        %v1534 = vld [vmem:[%s1521 + $0x60] sm:$0xff]
        %v1535 = vld [vmem:[%s1521 + $0x68] sm:$0xff]
        %v1536 = vld [vmem:[%s1521 + $0x70] sm:$0xff]
        %v1537 = vld [vmem:[%s1521 + $0x78] sm:$0xff]
        %1539 = vset.pattern.permute.xlu0 0
        %1540 = vperm.xlu0 %1539, %v1522
        %v1541 = vpop.permute.xlu0 %1540
        %1544 = vset.pattern.permute.xlu0 0
        %1545 = vperm.xlu0 %1544, %v1523
        %v1546 = vpop.permute.xlu0 %1545
        %1549 = vset.pattern.permute.xlu0 0
        %1550 = vperm.xlu0 %1549, %v1524
        %v1551 = vpop.permute.xlu0 %1550
        %1554 = vset.pattern.permute.xlu0 0
        %1555 = vperm.xlu0 %1554, %v1525
        %v1556 = vpop.permute.xlu0 %1555
        %1559 = vset.pattern.permute.xlu0 0
        %1560 = vperm.xlu0 %1559, %v1526
        %v1561 = vpop.permute.xlu0 %1560
        %1564 = vset.pattern.permute.xlu0 0
        %1565 = vperm.xlu0 %1564, %v1527
        %v1566 = vpop.permute.xlu0 %1565
        %1569 = vset.pattern.permute.xlu0 0
        %1570 = vperm.xlu0 %1569, %v1528
        %v1571 = vpop.permute.xlu0 %1570
        %1574 = vset.pattern.permute.xlu0 0
        %1575 = vperm.xlu0 %1574, %v1529
        %v1576 = vpop.permute.xlu0 %1575
        %1579 = vset.pattern.permute.xlu0 0
        %1580 = vperm.xlu0 %1579, %v1530
        %v1581 = vpop.permute.xlu0 %1580
        %1584 = vset.pattern.permute.xlu0 0
        %1585 = vperm.xlu0 %1584, %v1531
        %v1586 = vpop.permute.xlu0 %1585
        %1589 = vset.pattern.permute.xlu0 0
        %1590 = vperm.xlu0 %1589, %v1532
        %v1591 = vpop.permute.xlu0 %1590
        %1594 = vset.pattern.permute.xlu0 0
        %1595 = vperm.xlu0 %1594, %v1533
        %v1596 = vpop.permute.xlu0 %1595
        %1599 = vset.pattern.permute.xlu0 0
        %1600 = vperm.xlu0 %1599, %v1534
        %v1601 = vpop.permute.xlu0 %1600
        %1604 = vset.pattern.permute.xlu0 0
        %1605 = vperm.xlu0 %1604, %v1535
        %v1606 = vpop.permute.xlu0 %1605
        %1609 = vset.pattern.permute.xlu0 0
        %1610 = vperm.xlu0 %1609, %v1536
        %v1611 = vpop.permute.xlu0 %1610
        %1614 = vset.pattern.permute.xlu0 0
        %1615 = vperm.xlu0 %1614, %v1537
        %v1616 = vpop.permute.xlu0 %1615
        %v1634 = vunpack.c.l.b16 %v1505
        %v1635 = vunpack.c.l.b16 %v1506
        %v1636 = vunpack.c.l.b16 %v1507
        %v1637 = vunpack.c.l.b16 %v1508
        %v1638 = vunpack.c.l.b16 %v1509
        %v1639 = vunpack.c.l.b16 %v1510
        %v1640 = vunpack.c.l.b16 %v1511
        %v1641 = vunpack.c.l.b16 %v1512
        %v1642 = vunpack.c.l.b16 %v1513
        %v1643 = vunpack.c.l.b16 %v1514
        %v1644 = vunpack.c.l.b16 %v1515
        %v1645 = vunpack.c.l.b16 %v1516
        %v1646 = vunpack.c.l.b16 %v1517
        %v1647 = vunpack.c.l.b16 %v1518
        %v1648 = vunpack.c.l.b16 %v1519
        %v1649 = vunpack.c.l.b16 %v1520
        %v1650 = vpack.c.b16 %v1635, %v1634
        %v1651 = vpack.c.b16 %v1637, %v1636
        %v1652 = vpack.c.b16 %v1639, %v1638
        %v1653 = vpack.c.b16 %v1641, %v1640
        %v1654 = vpack.c.b16 %v1643, %v1642
        %v1655 = vpack.c.b16 %v1645, %v1644
        %v1656 = vpack.c.b16 %v1647, %v1646
        %v1657 = vpack.c.b16 %v1649, %v1648
        %v1682 = vunpack.c.l.b16 %v1488
        %v1683 = vunpack.c.l.b16 %v1489
        %v1684 = vunpack.c.l.b16 %v1490
        %v1685 = vunpack.c.l.b16 %v1491
        %v1686 = vunpack.c.l.b16 %v1492
        %v1687 = vunpack.c.l.b16 %v1493
        %v1688 = vunpack.c.l.b16 %v1494
        %v1689 = vunpack.c.l.b16 %v1495
        %v1690 = vunpack.c.l.b16 %v1496
        %v1691 = vunpack.c.l.b16 %v1497
        %v1692 = vunpack.c.l.b16 %v1498
        %v1693 = vunpack.c.l.b16 %v1499
        %v1694 = vunpack.c.l.b16 %v1500
        %v1695 = vunpack.c.l.b16 %v1501
        %v1696 = vunpack.c.l.b16 %v1502
        %v1697 = vunpack.c.l.b16 %v1503
        %v1698 = vpack.c.b16 %v1683, %v1682
        %v1699 = vpack.c.b16 %v1685, %v1684
        %v1700 = vpack.c.b16 %v1687, %v1686
        %v1701 = vpack.c.b16 %v1689, %v1688
        %v1702 = vpack.c.b16 %v1691, %v1690
        %v1703 = vpack.c.b16 %v1693, %v1692
        %v1704 = vpack.c.b16 %v1695, %v1694
        %v1705 = vpack.c.b16 %v1697, %v1696
        %1714 = vmatprep.subr.bf16.mxu0 0
        %1715 = vmatpush1.bf16.msra.mxu0 %v1698
        %1716 = vmatprep.subr.bf16.mxu0 0
        %1717 = vmatpush1.bf16.msra.mxu0 %v1699
        %1718 = vmatprep.subr.bf16.mxu0 0
        %1719 = vmatpush1.bf16.msra.mxu0 %v1700
        %1720 = vmatprep.subr.bf16.mxu0 0
        %1721 = vmatpush1.bf16.msra.mxu0 %v1701
        %1722 = vmatprep.subr.bf16.mxu0 0
        %1723 = vmatpush1.bf16.msra.mxu0 %v1702
        %1724 = vmatprep.subr.bf16.mxu0 0
        %1725 = vmatpush1.bf16.msra.mxu0 %v1703
        %1726 = vmatprep.subr.bf16.mxu0 0
        %1727 = vmatpush1.bf16.msra.mxu0 %v1704
        %1728 = vmatprep.subr.bf16.mxu0 0
        %1729 = vmatpush1.bf16.msra.mxu0 %v1705
        %1730 = vmatprep.subr.bf16.mxu0 0
        %1731 = vmatpush1.bf16.msra.mxu0 0
        %1732 = vmatprep.subr.bf16.mxu0 0
        %1733 = vmatpush1.bf16.msra.mxu0 0
        %1734 = vmatprep.subr.bf16.mxu0 0
        %1735 = vmatpush1.bf16.msra.mxu0 0
        %1736 = vmatprep.subr.bf16.mxu0 0
        %1737 = vmatpush1.bf16.msra.mxu0 0
        %1738 = vmatprep.subr.bf16.mxu0 0
        %1739 = vmatpush1.bf16.msra.mxu0 0
        %1740 = vmatprep.subr.bf16.mxu0 0
        %1741 = vmatpush1.bf16.msra.mxu0 0
        %1742 = vmatprep.subr.bf16.mxu0 0
        %1743 = vmatpush1.bf16.msra.mxu0 0
        %1744 = vmatprep.subr.bf16.mxu0 0
        %1745 = vmatpush1.bf16.msra.mxu0 0
        %1746 = vmatprep.mubr.bf16.mxu0 0
        %1747 = vmatmul.mubr.bf16.gmra.mrb[0].mxu0 %v1650
        %v1748 = vpop.f32.mrb[0].mxu0
        %v1749 = vadd.f32 %v1541, %v1748
        %v1750 = vpop.f32.mrb[0].mxu0
        %v1751 = vpop.f32.mrb[0].mxu0
        %v1752 = vadd.f32 %v1546, %v1751
        %v1753 = vpop.f32.mrb[0].mxu0
        %1754 = vmatprep.mubr.bf16.mxu0 0
        %1755 = vmatmul.mubr.bf16.gmra.mrb[0].mxu0 %v1651
        %v1756 = vpop.f32.mrb[0].mxu0
        %v1757 = vadd.f32 %v1551, %v1756
        %v1758 = vpop.f32.mrb[0].mxu0
        %v1759 = vpop.f32.mrb[0].mxu0
        %v1760 = vadd.f32 %v1556, %v1759
        %v1761 = vpop.f32.mrb[0].mxu0
        %1762 = vmatprep.mubr.bf16.mxu0 0
        %1763 = vmatmul.mubr.bf16.gmra.mrb[0].mxu0 %v1652
        %v1764 = vpop.f32.mrb[0].mxu0
        %v1765 = vadd.f32 %v1561, %v1764
        %v1766 = vpop.f32.mrb[0].mxu0
        %v1767 = vpop.f32.mrb[0].mxu0
        %v1768 = vadd.f32 %v1566, %v1767
        %v1769 = vpop.f32.mrb[0].mxu0
        %1770 = vmatprep.mubr.bf16.mxu0 0
        %1771 = vmatmul.mubr.bf16.gmra.mrb[0].mxu0 %v1653
        %v1772 = vpop.f32.mrb[0].mxu0
        %v1773 = vadd.f32 %v1571, %v1772
        %v1774 = vpop.f32.mrb[0].mxu0
        %v1775 = vpop.f32.mrb[0].mxu0
        %v1776 = vadd.f32 %v1576, %v1775
        %v1777 = vpop.f32.mrb[0].mxu0
        %1778 = vmatprep.mubr.bf16.mxu0 0
        %1779 = vmatmul.mubr.bf16.gmra.mrb[0].mxu0 %v1654
        %v1780 = vpop.f32.mrb[0].mxu0
        %v1781 = vadd.f32 %v1581, %v1780
        %v1782 = vpop.f32.mrb[0].mxu0
        %v1783 = vpop.f32.mrb[0].mxu0
        %v1784 = vadd.f32 %v1586, %v1783
        %v1785 = vpop.f32.mrb[0].mxu0
        %1786 = vmatprep.mubr.bf16.mxu0 0
        %1787 = vmatmul.mubr.bf16.gmra.mrb[0].mxu0 %v1655
        %v1788 = vpop.f32.mrb[0].mxu0
        %v1789 = vadd.f32 %v1591, %v1788
        %v1790 = vpop.f32.mrb[0].mxu0
        %v1791 = vpop.f32.mrb[0].mxu0
        %v1792 = vadd.f32 %v1596, %v1791
        %v1793 = vpop.f32.mrb[0].mxu0
        %1794 = vmatprep.mubr.bf16.mxu0 0
        %1795 = vmatmul.mubr.bf16.gmra.mrb[0].mxu0 %v1656
        %v1796 = vpop.f32.mrb[0].mxu0
        %v1797 = vadd.f32 %v1601, %v1796
        %v1798 = vpop.f32.mrb[0].mxu0
        %v1799 = vpop.f32.mrb[0].mxu0
        %v1800 = vadd.f32 %v1606, %v1799
        %v1801 = vpop.f32.mrb[0].mxu0
        %1802 = vmatprep.mubr.bf16.mxu0 0
        %1803 = vmatmul.mubr.bf16.gmra.mrb[0].mxu0 %v1657
        %v1804 = vpop.f32.mrb[0].mxu0
        %v1805 = vadd.f32 %v1611, %v1804
        %v1806 = vpop.f32.mrb[0].mxu0
        %v1807 = vpop.f32.mrb[0].mxu0
        %v1808 = vadd.f32 %v1616, %v1807
        %v1809 = vpop.f32.mrb[0].mxu0
        %1810 = vdwg.mxu0
        %v1811 = vmax.f32 %v1749, 0.0
        %v1812 = vmax.f32 %v1752, 0.0
        %v1813 = vmax.f32 %v1757, 0.0
        %v1814 = vmax.f32 %v1760, 0.0
        %v1815 = vmax.f32 %v1765, 0.0
        %v1816 = vmax.f32 %v1768, 0.0
        %v1817 = vmax.f32 %v1773, 0.0
        %v1818 = vmax.f32 %v1776, 0.0
        %v1819 = vmax.f32 %v1781, 0.0
        %v1820 = vmax.f32 %v1784, 0.0
        %v1821 = vmax.f32 %v1789, 0.0
        %v1822 = vmax.f32 %v1792, 0.0
        %v1823 = vmax.f32 %v1797, 0.0
        %v1824 = vmax.f32 %v1800, 0.0
        %v1825 = vmax.f32 %v1805, 0.0
        %v1826 = vmax.f32 %v1808, 0.0
        %v1828 = vsel %vm601, %v1811, 0
        %v1831 = vsel %vm601, %v1812, 0
        %v1834 = vsel %vm601, %v1813, 0
        %v1837 = vsel %vm601, %v1814, 0
        %v1840 = vsel %vm601, %v1815, 0
        %v1843 = vsel %vm601, %v1816, 0
        %v1846 = vsel %vm601, %v1817, 0
        %v1849 = vsel %vm601, %v1818, 0
        %v1852 = vsel %vm601, %v1819, 0
        %v1855 = vsel %vm601, %v1820, 0
        %v1858 = vsel %vm601, %v1821, 0
        %v1861 = vsel %vm601, %v1822, 0
        %v1864 = vsel %vm601, %v1823, 0
        %v1867 = vsel %vm601, %v1824, 0
        %v1870 = vsel %vm601, %v1825, 0
        %v1873 = vsel %vm601, %v1826, 0
        %1875 = vmatprep.subr.mxu0 0.0
        %1876 = vmatpush1.xpose.msra.mxu0 %v1828
        %1877 = vmatprep.subr.mxu0 0.0
        %1878 = vmatpush1.xpose.msra.mxu0 %v1831
        %1879 = vmatprep.subr.mxu0 0.0
        %1880 = vmatpush1.xpose.msra.mxu0 %v1834
        %1881 = vmatprep.subr.mxu0 0.0
        %1882 = vmatpush1.xpose.msra.mxu0 %v1837
        %1883 = vmatprep.subr.mxu0 0.0
        %1884 = vmatpush1.xpose.msra.mxu0 %v1840
        %1885 = vmatprep.subr.mxu0 0.0
        %1886 = vmatpush1.xpose.msra.mxu0 %v1843
        %1887 = vmatprep.subr.mxu0 0.0
        %1888 = vmatpush1.xpose.msra.mxu0 %v1846
        %1889 = vmatprep.subr.mxu0 0.0
        %1890 = vmatpush1.xpose.msra.mxu0 %v1849
        %1891 = vmatprep.subr.mxu0 0.0
        %1892 = vmatpush1.xpose.msra.mxu0 %v1852
        %1893 = vmatprep.subr.mxu0 0.0
        %1894 = vmatpush1.xpose.msra.mxu0 %v1855
        %1895 = vmatprep.subr.mxu0 0.0
        %1896 = vmatpush1.xpose.msra.mxu0 %v1858
        %1897 = vmatprep.subr.mxu0 0.0
        %1898 = vmatpush1.xpose.msra.mxu0 %v1861
        %1899 = vmatprep.subr.mxu0 0.0
        %1900 = vmatpush1.xpose.msra.mxu0 %v1864
        %1901 = vmatprep.subr.mxu0 0.0
        %1902 = vmatpush1.xpose.msra.mxu0 %v1867
        %1903 = vmatprep.subr.mxu0 0.0
        %1904 = vmatpush1.xpose.msra.mxu0 %v1870
        %1905 = vmatprep.subr.mxu0 0.0
        %1906 = vmatpush1.xpose.msra.mxu0 %v1873
        %1907 = vmatprep.subr.mxu0 0.0
        %1908 = vmatpush1.xpose.msra.mxu0 0.0
        %1909 = vmatprep.subr.mxu0 0.0
        %1910 = vmatpush1.xpose.msra.mxu0 0.0
        %1911 = vmatprep.subr.mxu0 0.0
        %1912 = vmatpush1.xpose.msra.mxu0 0.0
        %1913 = vmatprep.subr.mxu0 0.0
        %1914 = vmatpush1.xpose.msra.mxu0 0.0
        %1915 = vmatprep.subr.mxu0 0.0
        %1916 = vmatpush1.xpose.msra.mxu0 0.0
        %1917 = vmatprep.subr.mxu0 0.0
        %1918 = vmatpush1.xpose.msra.mxu0 0.0
        %1919 = vmatprep.subr.mxu0 0.0
        %1920 = vmatpush1.xpose.msra.mxu0 0.0
        %1921 = vmatprep.subr.mxu0 0.0
        %1922 = vmatpush1.xpose.msra.mxu0 0.0
        %1923 = vmatprep.subr.mxu0 0.0
        %1924 = vmatpush1.xpose.msra.mxu0 0.0
        %1925 = vmatprep.subr.mxu0 0.0
        %1926 = vmatpush1.xpose.msra.mxu0 0.0
        %1927 = vmatprep.subr.mxu0 0.0
        %1928 = vmatpush1.xpose.msra.mxu0 0.0
        %1929 = vmatprep.subr.mxu0 0.0
        %1930 = vmatpush1.xpose.msra.mxu0 0.0
        %1931 = vmatprep.subr.mxu0 0.0
        %1932 = vmatpush1.xpose.msra.mxu0 0.0
        %1933 = vmatprep.subr.mxu0 0.0
        %1934 = vmatpush1.xpose.msra.mxu0 0.0
        %1935 = vmatprep.subr.mxu0 0.0
        %1936 = vmatpush1.xpose.msra.mxu0 0.0
        %1937 = vmatprep.subr.mxu0 0.0
        %1938 = vmatpush1.xpose.msra.mxu0 0.0
        %1939 = vmatprep.mubr.f32.mxu0 0.0
        %1940 = vmatmul.mubr.f32.gmra.mrb[0].mxu0 %v1828
        %v1941 = vpop.f32.mrb[0].mxu0
        %v1942 = vadd.f32 0.0, %v1941
        %v1943 = vpop.f32.mrb[0].mxu0
        %1944 = vmatprep.mubr.f32.mxu0 0.0
        %1945 = vmatmul.mubr.f32.gmra.mrb[0].mxu0 %v1831
        %v1946 = vpop.f32.mrb[0].mxu0
        %v1947 = vadd.f32 0.0, %v1946
        %v1948 = vpop.f32.mrb[0].mxu0
        %1949 = vmatprep.mubr.f32.mxu0 0.0
        %1950 = vmatmul.mubr.f32.gmra.mrb[0].mxu0 %v1834
        %v1951 = vpop.f32.mrb[0].mxu0
        %v1952 = vadd.f32 0.0, %v1951
        %v1953 = vpop.f32.mrb[0].mxu0
        %1954 = vmatprep.mubr.f32.mxu0 0.0
        %1955 = vmatmul.mubr.f32.gmra.mrb[0].mxu0 %v1837
        %v1956 = vpop.f32.mrb[0].mxu0
        %v1957 = vadd.f32 0.0, %v1956
        %v1958 = vpop.f32.mrb[0].mxu0
        %1959 = vmatprep.mubr.f32.mxu0 0.0
        %1960 = vmatmul.mubr.f32.gmra.mrb[0].mxu0 %v1840
        %v1961 = vpop.f32.mrb[0].mxu0
        %v1962 = vadd.f32 0.0, %v1961
        %v1963 = vpop.f32.mrb[0].mxu0
        %1964 = vmatprep.mubr.f32.mxu0 0.0
        %1965 = vmatmul.mubr.f32.gmra.mrb[0].mxu0 %v1843
        %v1966 = vpop.f32.mrb[0].mxu0
        %v1967 = vadd.f32 0.0, %v1966
        %v1968 = vpop.f32.mrb[0].mxu0
        %1969 = vmatprep.mubr.f32.mxu0 0.0
        %1970 = vmatmul.mubr.f32.gmra.mrb[0].mxu0 %v1846
        %v1971 = vpop.f32.mrb[0].mxu0
        %v1972 = vadd.f32 0.0, %v1971
        %v1973 = vpop.f32.mrb[0].mxu0
        %1974 = vmatprep.mubr.f32.mxu0 0.0
        %1975 = vmatmul.mubr.f32.gmra.mrb[0].mxu0 %v1849
        %v1976 = vpop.f32.mrb[0].mxu0
        %v1977 = vadd.f32 0.0, %v1976
        %v1978 = vpop.f32.mrb[0].mxu0
        %1979 = vmatprep.mubr.f32.mxu0 0.0
        %1980 = vmatmul.mubr.f32.gmra.mrb[0].mxu0 %v1852
        %v1981 = vpop.f32.mrb[0].mxu0
        %v1982 = vadd.f32 0.0, %v1981
        %v1983 = vpop.f32.mrb[0].mxu0
        %1984 = vmatprep.mubr.f32.mxu0 0.0
        %1985 = vmatmul.mubr.f32.gmra.mrb[0].mxu0 %v1855
        %v1986 = vpop.f32.mrb[0].mxu0
        %v1987 = vadd.f32 0.0, %v1986
        %v1988 = vpop.f32.mrb[0].mxu0
        %1989 = vmatprep.mubr.f32.mxu0 0.0
        %1990 = vmatmul.mubr.f32.gmra.mrb[0].mxu0 %v1858
        %v1991 = vpop.f32.mrb[0].mxu0
        %v1992 = vadd.f32 0.0, %v1991
        %v1993 = vpop.f32.mrb[0].mxu0
        %1994 = vmatprep.mubr.f32.mxu0 0.0
        %1995 = vmatmul.mubr.f32.gmra.mrb[0].mxu0 %v1861
        %v1996 = vpop.f32.mrb[0].mxu0
        %v1997 = vadd.f32 0.0, %v1996
        %v1998 = vpop.f32.mrb[0].mxu0
        %1999 = vmatprep.mubr.f32.mxu0 0.0
        %2000 = vmatmul.mubr.f32.gmra.mrb[0].mxu0 %v1864
        %v2001 = vpop.f32.mrb[0].mxu0
        %v2002 = vadd.f32 0.0, %v2001
        %v2003 = vpop.f32.mrb[0].mxu0
        %2004 = vmatprep.mubr.f32.mxu0 0.0
        %2005 = vmatmul.mubr.f32.gmra.mrb[0].mxu0 %v1867
        %v2006 = vpop.f32.mrb[0].mxu0
        %v2007 = vadd.f32 0.0, %v2006
        %v2008 = vpop.f32.mrb[0].mxu0
        %2009 = vmatprep.mubr.f32.mxu0 0.0
        %2010 = vmatmul.mubr.f32.gmra.mrb[0].mxu0 %v1870
        %v2011 = vpop.f32.mrb[0].mxu0
        %v2012 = vadd.f32 0.0, %v2011
        %v2013 = vpop.f32.mrb[0].mxu0
        %2014 = vmatprep.mubr.f32.mxu0 0.0
        %2015 = vmatmul.mubr.f32.gmra.mrb[0].mxu0 %v1873
        %v2016 = vpop.f32.mrb[0].mxu0
        %v2017 = vadd.f32 0.0, %v2016
        %v2018 = vpop.f32.mrb[0].mxu0
        %2019 = vdwg.mxu0
        %v2020 = vpack.c.bf16 %v1947, %v1942
        %v2021 = vpack.c.bf16 %v1957, %v1952
        %v2022 = vpack.c.bf16 %v1967, %v1962
        %v2023 = vpack.c.bf16 %v1977, %v1972
        %v2024 = vpack.c.bf16 %v1987, %v1982
        %v2025 = vpack.c.bf16 %v1997, %v1992
        %v2026 = vpack.c.bf16 %v2007, %v2002
        %v2027 = vpack.c.bf16 %v2017, %v2012
        %v2036 = vunpack.c.l.b16 %v2020
        %v2037 = vunpack.c.h.b16 %v2020
        %v2038 = vunpack.c.l.b16 %v2021
        %v2039 = vunpack.c.h.b16 %v2021
        %v2040 = vunpack.c.l.b16 %v2022
        %v2041 = vunpack.c.h.b16 %v2022
        %v2042 = vunpack.c.l.b16 %v2023
        %v2043 = vunpack.c.h.b16 %v2023
        %v2044 = vunpack.c.l.b16 %v2024
        %v2045 = vunpack.c.h.b16 %v2024
        %v2046 = vunpack.c.l.b16 %v2025
        %v2047 = vunpack.c.h.b16 %v2025
        %v2048 = vunpack.c.l.b16 %v2026
        %v2049 = vunpack.c.h.b16 %v2026
        %v2050 = vunpack.c.l.b16 %v2027
        %v2051 = vunpack.c.h.b16 %v2027
        %v2052 = vpack.c.b16 %v2036, %v2036
        %v2053 = vpack.c.b16 %v2037, %v2037
        %v2054 = vpack.c.b16 %v2038, %v2038
        %v2055 = vpack.c.b16 %v2039, %v2039
        %v2056 = vpack.c.b16 %v2040, %v2040
        %v2057 = vpack.c.b16 %v2041, %v2041
        %v2058 = vpack.c.b16 %v2042, %v2042
        %v2059 = vpack.c.b16 %v2043, %v2043
        %v2060 = vpack.c.b16 %v2044, %v2044
        %v2061 = vpack.c.b16 %v2045, %v2045
        %v2062 = vpack.c.b16 %v2046, %v2046
        %v2063 = vpack.c.b16 %v2047, %v2047
        %v2064 = vpack.c.b16 %v2048, %v2048
        %v2065 = vpack.c.b16 %v2049, %v2049
        %v2066 = vpack.c.b16 %v2050, %v2050
        %v2067 = vpack.c.b16 %v2051, %v2051
        %s2084 = scalar_lea.vmem %s247, 128 [#allocation2]
        %2085 = vst [vmem:[%s2084] sm:$0xf] %v2052
        %2086 = vst [vmem:[%s2084 + $0x4] sm:$0xf] %v2053
        %2087 = vst [vmem:[%s2084 + $0x8] sm:$0xf] %v2054
        %2088 = vst [vmem:[%s2084 + $0xc] sm:$0xf] %v2055
        %2089 = vst [vmem:[%s2084 + $0x10] sm:$0xf] %v2056
        %2090 = vst [vmem:[%s2084 + $0x14] sm:$0xf] %v2057
        %2091 = vst [vmem:[%s2084 + $0x18] sm:$0xf] %v2058
        %2092 = vst [vmem:[%s2084 + $0x1c] sm:$0xf] %v2059
        %2093 = vst [vmem:[%s2084 + $0x20] sm:$0xf] %v2060
        %2094 = vst [vmem:[%s2084 + $0x24] sm:$0xf] %v2061
        %2095 = vst [vmem:[%s2084 + $0x28] sm:$0xf] %v2062
        %2096 = vst [vmem:[%s2084 + $0x2c] sm:$0xf] %v2063
        %2097 = vst [vmem:[%s2084 + $0x30] sm:$0xf] %v2064
        %2098 = vst [vmem:[%s2084 + $0x34] sm:$0xf] %v2065
        %2099 = vst [vmem:[%s2084 + $0x38] sm:$0xf] %v2066
        %2100 = vst [vmem:[%s2084 + $0x3c] sm:$0xf] %v2067
        %s2101 = sand.u32 %s147, 1
        %s2102 = scalar_lea.sflag [#allocation3], %s2101
        %s2103 = sand.u32 %s147, 1
        %s2104 = smul.addr %s2103, 192
        %s2105 = scalar_lea.vmem [#allocation2], %s2104
        // Predicated region
        $region41: #{tpu_custom_call.1} parent=39 // pred_check
          %p2106 = pneg %p157
        $region42: #{tpu_custom_call.1} parent=39 // pred_check_branch
          %2108 = sbr.rel (%p2106) target = $region44
        $region43: #{tpu_custom_call.1} parent=39 // pred_region
          %s2110 = ssub.s32 3072, 3072
          %2111 = vsyncadd %s2102, %s2110
          %s2112 = smul.addr %s19, 48
          %s2113 = smul.addr %s2112, 64
          %s2114 = scalar_lea.hbm %s5, %s2113
          %s2115 = sshll.u32 %s2105, 4
          %s2116 = int_to_ptr.vmem [resolvable:$true] %s2115
          %2121 = dma.vmem_to_hbm [thread:$0]  %s2116, 3072, %s2114, %s2102, 64, 64, 4
        $region44: #{tpu_custom_call.1} parent=39 // pred_fallthru
          _
      $region40: #{tpu_custom_call.1} parent=5 // pred_fallthru
        _
      %p2122 = scmp.le.s32.totalorder 2, %s14
      // Predicated region
      $region45: #{tpu_custom_call.1} parent=5 // pred_check
        %p2123 = pneg %p2122
      $region46: #{tpu_custom_call.1} parent=5 // pred_check_branch
        %2125 = sbr.rel (%p2123) target = $region48
      $region47: #{tpu_custom_call.1} parent=5 // pred_region
        %s2126 = ssub.s32 %s14, 2
        // Predicated region
        $region49: #{tpu_custom_call.1} parent=47 // pred_check
          %p2127 = pneg %p163
        $region50: #{tpu_custom_call.1} parent=47 // pred_check_branch
          %2129 = sbr.rel (%p2127) target = $region52
        $region51: #{tpu_custom_call.1} parent=47 // pred_region
          %s2130 = sand.u32 %s148, 1
          %s2131 = scalar_lea.sflag [#allocation3], %s2130
          %s2132 = sand.u32 %s148, 1
          %s2133 = smul.addr %s2132, 192
          %s2134 = scalar_lea.vmem [#allocation2], %s2133
          %2135 = dma.done %s2131, 3072
        $region52: #{tpu_custom_call.1} parent=47 // pred_fallthru
          _
      $region48: #{tpu_custom_call.1} parent=5 // pred_fallthru
        _
    $region6: #{tpu_custom_call.1} parent=1 // loop_footer
      %s18 = sadd.s32 1, %s14
    $region7: #{tpu_custom_call.1} parent=1 // loop_footer_branch
      %13 = sbr.rel target = $region3
    $region8: #{tpu_custom_call.1} parent=1 // loop_exit
      _
    %2136 = vsyncpa [#allocation3], 1
    %s2137 = scalar_lea.sflag [#allocation3], 1
    %2138 = vsyncpa %s2137, 1

</llo_original>
